<compile_context>
chip_gen: v5e
topology: v5e:2x2
jax: 0.10.0
libtpu: 0.0.40
codegen_flags: <defaults>
</compile_context>

<pallas_src>
import functools

import jax
import jax.numpy as jnp
from jax import lax
from jax.experimental import pallas as pl
from jax.experimental.pallas import tpu as pltpu


def _conv_stack_kernel(*refs, n_batch, cfg, kpads):
    """Fused Conv2d(k=2, s=1) + ReLU stack.

    refs = [x_slab,
            bias per layer...,            (f32, auto-DMA'd to VMEM)
            banded weight per layer...,   (bf16, pl.ANY -> manual DMA)
            out_slab,
            weight VMEM buffer per layer...,
            patch slab per layer...,
            dma_semaphores]
    Slab layout:  a[n*H + h, w*C + c] = x[n, h, w, c]  (lane-dense).
    """
    nl = len(cfg)
    x_ref = refs[0]
    b_refs = refs[1:1 + nl]
    w_hbm = refs[1 + nl:1 + 2 * nl]
    o_ref = refs[1 + 2 * nl]
    w_vmem = refs[2 + 2 * nl:2 + 3 * nl]
    p_refs = refs[2 + 3 * nl:2 + 4 * nl]
    sems = refs[2 + 4 * nl]

    # Kick off every layer's banded-weight DMA up front; wait lazily right
    # before each layer's matmul so later layers' weight traffic overlaps
    # earlier layers' compute.
    for l in range(nl):
        pltpu.make_async_copy(w_hbm[l], w_vmem[l], sems.at[l]).start()

    a = x_ref[...]                                       # bf16 (N*H0, W0*C0)
    for l, (H, W, C, Cout) in enumerate(cfg):
        Ho, Wo = H - 1, W - 1
        Kpad = kpads[l]
        p_ref = p_refs[l]

        # Zero once so the lane-pad columns contribute exactly 0 to the matmul
        # (uninitialized VMEM could hold NaN bit patterns).
        p_ref[...] = jnp.zeros_like(p_ref)

        # Banded im2col: per image, two row-shifted full-lane-width copies at
        # 128-aligned destination column offsets (0 and Kpad):
        #   P[n*Ho + ho, kh*Kpad + w*C + c] = x[n, ho + kh, w, c]
        for kh in (0, 1):
            for n in range(n_batch):
                p_ref[n * Ho:(n + 1) * Ho, kh * Kpad:kh * Kpad + W * C] = (
                    a[n * H + kh:n * H + kh + Ho, :])

        # Wait for this layer's banded weight, then one lane-dense bf16 MXU
        # matmul with f32 accumulation; bias + ReLU stay f32.
        pltpu.make_async_copy(w_hbm[l], w_vmem[l], sems.at[l]).wait()
        z = jnp.dot(p_ref[...], w_vmem[l][...],
                    preferred_element_type=jnp.float32)  # (N*Ho, Wo*Cout) f32
        z = jnp.maximum(z + b_refs[l][...], 0.0)

        if l + 1 < nl:
            a = z.astype(jnp.bfloat16)                   # stays on-chip
        else:
            o_ref[...] = z                               # lane-dense f32 store


def prepare_params(params, input_dim):
    """One-time packing (hoisted off the hot path).

    OIHW conv weights -> banded slab-GEMM weights (kw shift folded in):
      Wband[kh*Kpad + w*Cin + c, wo*Cout + d] = w[kh, w - wo, c, d]
                                                if (w - wo) in {0, 1} else 0
    Rows [W*Cin, Kpad) of each kh block are zero (lane padding).
    Returns (packed, cfg, kpads, out_chw); cfg[l] = (H, W, Cin, Cout) of the
    layer-l *input*; kpads[l] = 128-padded W*Cin for layer l.
    """
    C, H, W = int(input_dim[0]), int(input_dim[1]), int(input_dim[2])
    packed, cfg, kpads = [], [], []
    for w_oihw, b in params:
        Cout, Cin, KH, KW = w_oihw.shape
        assert (KH, KW) == (2, 2) and Cin == C
        Ho, Wo = H - 1, W - 1
        Kpad = ((W * Cin + 127) // 128) * 128
        w_hwio = jnp.transpose(w_oihw, (2, 3, 1, 0)).astype(jnp.float32)

        Wband = jnp.zeros((2 * Kpad, Wo * Cout), jnp.float32)
        for kh in range(2):
            blk = jnp.zeros((W * Cin, Wo * Cout), jnp.float32)
            for kw in range(2):
                # sel[w, wo] = 1 iff w == wo + kw
                sel = jnp.zeros((W, Wo), jnp.float32)
                sel = sel.at[kw:kw + Wo, :].set(jnp.eye(Wo, dtype=jnp.float32))
                blk = blk + jnp.einsum(
                    "jm,cd->jcmd", sel, w_hwio[kh, kw]).reshape(W * Cin, Wo * Cout)
            Wband = Wband.at[kh * Kpad:kh * Kpad + W * Cin, :].set(blk)

        bias = jnp.tile(b.astype(jnp.float32), Wo).reshape(1, Wo * Cout)
        packed.append((Wband.astype(jnp.bfloat16), bias))
        cfg.append((H, W, int(Cin), int(Cout)))
        kpads.append(int(Kpad))
        C, H, W = int(Cout), Ho, Wo
    return packed, tuple(cfg), tuple(kpads), (C, H, W)


@functools.partial(jax.jit, static_argnames=("cfg", "kpads", "out_chw"))
def conv_unit_forward(x_nchw, packed, *, cfg, kpads, out_chw):
    """Equivalent of Conv_unit.forward: seq(x).view(N, 1, -1)."""
    N = x_nchw.shape[0]
    H0, W0, C0 = cfg[0][0], cfg[0][1], cfg[0][2]
    Cf, Hf, Wf = out_chw
    nl = len(cfg)

    # NCHW -> lane-dense bf16 slab (N*H0, W0*C0)  (tiny, contiguous glue).
    x_slab = jnp.transpose(x_nchw, (0, 2, 3, 1)).reshape(N * H0, W0 * C0)
    x_slab = x_slab.astype(jnp.bfloat16)

    biases = [b for (_, b) in packed]
    weights = [w for (w, _) in packed]

    flat_inputs = [x_slab] + biases + weights
    in_specs = [pl.BlockSpec((N * H0, W0 * C0), lambda i: (0, 0))]
    in_specs += [pl.BlockSpec(b.shape, lambda i: (0, 0)) for b in biases]
    in_specs += [pl.BlockSpec(memory_space=pl.ANY) for _ in weights]
    # TODO(synk): once batch grows, add pipeline_mode=pl.Buffered(1) to the
    # single-use x_slab/bias specs and raise vmem_limit_bytes (16 MiB scoped
    # default on v5e, 32 MiB on v6e/v7x).

    scratch_shapes = (
        [pltpu.VMEM(w.shape, jnp.bfloat16) for w in weights]       # weight bufs
        + [pltpu.VMEM((N * (h - 1), 2 * kp), jnp.bfloat16)         # patch slabs
           for (h, _, _, _), kp in zip(cfg, kpads)]
        + [pltpu.SemaphoreType.DMA((nl,))]
    )

    kernel = functools.partial(_conv_stack_kernel, n_batch=N, cfg=cfg, kpads=kpads)

    # TODO(synk): for large batches (esp. v7x: 2 TCs, 64 MiB VMEM), tile the
    # N*Ho rows over a leading "parallel" grid axis; at batch=2 grid=(1,) is
    # the right call (whole net is a few tens of KB of activations).
    out_slab = pl.pallas_call(
        kernel,
        out_shape=jax.ShapeDtypeStruct((N * Hf, Wf * Cf), jnp.float32),
        grid=(1,),
        in_specs=in_specs,
        out_specs=pl.BlockSpec((N * Hf, Wf * Cf), lambda i: (0, 0)),
        scratch_shapes=scratch_shapes,
        compiler_params=pltpu.CompilerParams(dimension_semantics=("arbitrary",)),
    )(*flat_inputs)

    # Slab is NHWC order; PyTorch flattens NCHW, so reorder (tiny) and flatten.
    # TODO(synk): if the consumer is a dense layer, permute its weight rows
    # offline to accept the NHWC-flat slab and drop this reorder entirely.
    y = out_slab.reshape(N, Hf, Wf, Cf).transpose(0, 3, 1, 2)
    return y.reshape(N, 1, -1)


def conv_unit_reference(x_nchw, params):
    """Pure-JAX (XLA conv, f32) reference mirroring PyTorch NCHW/OIHW semantics."""
    x = x_nchw
    for w_oihw, b in params:
        x = lax.conv_general_dilated(
            x, w_oihw, window_strides=(1, 1), padding='VALID',
            dimension_numbers=('NCHW', 'OIHW', 'NCHW'))
        x = jnp.maximum(x + b[None, :, None, None], 0.0)
    N = x.shape[0]
    return x.reshape(N, 1, -1)


def init_params(key, input_dim, conv_dims, output_dim):
    """Deterministic init. Conv_unit channels: [input_dim[0]] + conv_dims + [output_dim]."""
    dims = [input_dim[0]] + list(conv_dims) + [output_dim]
    params = []
    for i in range(len(dims) - 1):
        key, kw, kb = jax.random.split(key, 3)
        cin, cout = dims[i], dims[i + 1]
        fan_in = cin * 2 * 2
        bound = 1.0 / (fan_in ** 0.5)
        w = jax.random.uniform(kw, (cout, cin, 2, 2), jnp.float32, -bound, bound)
        b = jax.random.uniform(kb, (cout,), jnp.float32, -bound, bound)
        params.append((w, b))
    return params


if __name__ == "__main__":
    key = jax.random.PRNGKey(0)
    input_dim = [4, 16, 16]     # (C, H, W) as PyTorch would get it
    conv_dims = [8, 16]
    output_dim = 32
    batch = 2

    kx, kp = jax.random.split(key)
    x = jax.random.normal(kx, (batch, *input_dim), jnp.float32)   # NCHW
    params = init_params(kp, input_dim, conv_dims, output_dim)

    packed, cfg, kpads, out_chw = prepare_params(params, input_dim)  # one-time pack

    out = jax.block_until_ready(
        conv_unit_forward(x, packed, cfg=cfg, kpads=kpads, out_chw=out_chw))
    ref = jax.block_until_ready(conv_unit_reference(x, params))

    # spatial: 16 -> 15 -> 14 -> 13 ; channels: 4 -> 8 -> 16 -> 32
    assert out.shape == (batch, 1, output_dim * 13 * 13), out.shape
    # bf16 weights/activations (f32 accumulate) -> loosened tolerance.
    assert jnp.allclose(out, ref, atol=5e-2, rtol=5e-2), "mismatch vs reference"
    print("KERNEL_OK")
</pallas_src>

<mosaic_0001>
module attributes {stable_mosaic.version = 11 : i64} {
  func.func @_conv_stack_kernel(%arg0: i32, %arg1: memref<32x64xbf16, #tpu.memory_space<vmem>>, %arg2: memref<1x120xf32, #tpu.memory_space<vmem>>, %arg3: memref<1x224xf32, #tpu.memory_space<vmem>>, %arg4: memref<1x416xf32, #tpu.memory_space<vmem>>, %arg5: memref<256x120xbf16, #tpu.memory_space<any>>, %arg6: memref<256x224xbf16, #tpu.memory_space<any>>, %arg7: memref<512x416xbf16, #tpu.memory_space<any>>, %arg8: memref<26x416xf32, #tpu.memory_space<vmem>>, %arg9: memref<256x120xbf16, #tpu.memory_space<vmem>>, %arg10: memref<256x224xbf16, #tpu.memory_space<vmem>>, %arg11: memref<512x416xbf16, #tpu.memory_space<vmem>>, %arg12: memref<30x256xbf16, #tpu.memory_space<vmem>>, %arg13: memref<28x256xbf16, #tpu.memory_space<vmem>>, %arg14: memref<26x512xbf16, #tpu.memory_space<vmem>>, %arg15: memref<3x!tpu.dma_semaphore, #tpu.memory_space<semaphore_mem>>) attributes {dimension_semantics = [#tpu.dimension_semantics<arbitrary>], iteration_bounds = array<i64: 1>, scalar_prefetch = 0 : i64, scratch_operands = 7 : i64, tpu.core_type = #tpu.core_type<tc>, window_params = [{pipeline_mode = #tpu.pipeline_mode<synchronous>, transform_indices = @transform_0, window_bounds = array<i64: 32, 64>}, {pipeline_mode = #tpu.pipeline_mode<synchronous>, transform_indices = @transform_1, window_bounds = array<i64: 1, 120>}, {pipeline_mode = #tpu.pipeline_mode<synchronous>, transform_indices = @transform_2, window_bounds = array<i64: 1, 224>}, {pipeline_mode = #tpu.pipeline_mode<synchronous>, transform_indices = @transform_3, window_bounds = array<i64: 1, 416>}, {}, {}, {}, {pipeline_mode = #tpu.pipeline_mode<synchronous>, transform_indices = @transform_7, window_bounds = array<i64: 26, 416>}]} {
    %c0_i32 = arith.constant 0 : i32
    %0 = tpu.memref_slice %arg15[%c0_i32] : memref<3x!tpu.dma_semaphore, #tpu.memory_space<semaphore_mem>> -> memref<1x!tpu.dma_semaphore, #tpu.memory_space<semaphore_mem>>
    %1 = tpu.memref_squeeze %0 : memref<1x!tpu.dma_semaphore, #tpu.memory_space<semaphore_mem>> -> memref<!tpu.dma_semaphore, #tpu.memory_space<semaphore_mem>>
    tpu.enqueue_dma source(%arg5 : memref<256x120xbf16, #tpu.memory_space<any>>) target(%arg9 : memref<256x120xbf16, #tpu.memory_space<vmem>>) target_semaphore(%1 : memref<!tpu.dma_semaphore, #tpu.memory_space<semaphore_mem>>)
    %c1_i32 = arith.constant 1 : i32
    %2 = tpu.memref_slice %arg15[%c1_i32] : memref<3x!tpu.dma_semaphore, #tpu.memory_space<semaphore_mem>> -> memref<1x!tpu.dma_semaphore, #tpu.memory_space<semaphore_mem>>
    %3 = tpu.memref_squeeze %2 : memref<1x!tpu.dma_semaphore, #tpu.memory_space<semaphore_mem>> -> memref<!tpu.dma_semaphore, #tpu.memory_space<semaphore_mem>>
    tpu.enqueue_dma source(%arg6 : memref<256x224xbf16, #tpu.memory_space<any>>) target(%arg10 : memref<256x224xbf16, #tpu.memory_space<vmem>>) target_semaphore(%3 : memref<!tpu.dma_semaphore, #tpu.memory_space<semaphore_mem>>)
    %c2_i32 = arith.constant 2 : i32
    %4 = tpu.memref_slice %arg15[%c2_i32] : memref<3x!tpu.dma_semaphore, #tpu.memory_space<semaphore_mem>> -> memref<1x!tpu.dma_semaphore, #tpu.memory_space<semaphore_mem>>
    %5 = tpu.memref_squeeze %4 : memref<1x!tpu.dma_semaphore, #tpu.memory_space<semaphore_mem>> -> memref<!tpu.dma_semaphore, #tpu.memory_space<semaphore_mem>>
    tpu.enqueue_dma source(%arg7 : memref<512x416xbf16, #tpu.memory_space<any>>) target(%arg11 : memref<512x416xbf16, #tpu.memory_space<vmem>>) target_semaphore(%5 : memref<!tpu.dma_semaphore, #tpu.memory_space<semaphore_mem>>)
    %c0 = arith.constant 0 : index
    %c0_0 = arith.constant 0 : index
    %6 = vector.load %arg1[%c0, %c0_0] : memref<32x64xbf16, #tpu.memory_space<vmem>>, vector<32x64xbf16>
    %cst = arith.constant 0.000000e+00 : bf16
    %7 = vector.broadcast %cst : bf16 to vector<30x256xbf16>
    %c0_1 = arith.constant 0 : index
    %c0_2 = arith.constant 0 : index
    %8 = vector.load %arg12[%c0_1, %c0_2] : memref<30x256xbf16, #tpu.memory_space<vmem>>, vector<30x256xbf16>
    tpu.vector_store %arg12[%c0_1, %c0_2], %7 {strides = array<i32>} : memref<30x256xbf16, #tpu.memory_space<vmem>>, vector<30x256xbf16>,
    %9 = vector.extract_strided_slice %6 {offsets = [0, 0], sizes = [15, 64], strides = [1, 1]} : vector<32x64xbf16> to vector<15x64xbf16>
    %c0_3 = arith.constant 0 : index
    %c0_4 = arith.constant 0 : index
    %10 = vector.load %arg12[%c0_3, %c0_4] : memref<30x256xbf16, #tpu.memory_space<vmem>>, vector<15x64xbf16>
    tpu.vector_store %arg12[%c0_3, %c0_4], %9 {strides = array<i32>} : memref<30x256xbf16, #tpu.memory_space<vmem>>, vector<15x64xbf16>,
    %11 = vector.extract_strided_slice %6 {offsets = [16, 0], sizes = [15, 64], strides = [1, 1]} : vector<32x64xbf16> to vector<15x64xbf16>
    %c15 = arith.constant 15 : index
    %c0_5 = arith.constant 0 : index
    %12 = vector.load %arg12[%c15, %c0_5] : memref<30x256xbf16, #tpu.memory_space<vmem>>, vector<15x64xbf16>
    tpu.vector_store %arg12[%c15, %c0_5], %11 {strides = array<i32>} : memref<30x256xbf16, #tpu.memory_space<vmem>>, vector<15x64xbf16>,
    %13 = vector.extract_strided_slice %6 {offsets = [1, 0], sizes = [15, 64], strides = [1, 1]} : vector<32x64xbf16> to vector<15x64xbf16>
    %c0_6 = arith.constant 0 : index
    %c128 = arith.constant 128 : index
    %14 = vector.load %arg12[%c0_6, %c128] : memref<30x256xbf16, #tpu.memory_space<vmem>>, vector<15x64xbf16>
    tpu.vector_store %arg12[%c0_6, %c128], %13 {strides = array<i32>} : memref<30x256xbf16, #tpu.memory_space<vmem>>, vector<15x64xbf16>,
    %15 = vector.extract_strided_slice %6 {offsets = [17, 0], sizes = [15, 64], strides = [1, 1]} : vector<32x64xbf16> to vector<15x64xbf16>
    %c15_7 = arith.constant 15 : index
    %c128_8 = arith.constant 128 : index
    %16 = vector.load %arg12[%c15_7, %c128_8] : memref<30x256xbf16, #tpu.memory_space<vmem>>, vector<15x64xbf16>
    tpu.vector_store %arg12[%c15_7, %c128_8], %15 {strides = array<i32>} : memref<30x256xbf16, #tpu.memory_space<vmem>>, vector<15x64xbf16>,
    %c0_i32_9 = arith.constant 0 : i32
    %17 = tpu.memref_slice %arg15[%c0_i32_9] : memref<3x!tpu.dma_semaphore, #tpu.memory_space<semaphore_mem>> -> memref<1x!tpu.dma_semaphore, #tpu.memory_space<semaphore_mem>>
    %18 = tpu.memref_squeeze %17 : memref<1x!tpu.dma_semaphore, #tpu.memory_space<semaphore_mem>> -> memref<!tpu.dma_semaphore, #tpu.memory_space<semaphore_mem>>
    tpu.wait_dma2 semaphore(%18 : memref<!tpu.dma_semaphore, #tpu.memory_space<semaphore_mem>>) src(%arg5 : memref<256x120xbf16, #tpu.memory_space<any>>) dst(%arg9 : memref<256x120xbf16, #tpu.memory_space<vmem>>)
    %c0_10 = arith.constant 0 : index
    %c0_11 = arith.constant 0 : index
    %19 = vector.load %arg12[%c0_10, %c0_11] : memref<30x256xbf16, #tpu.memory_space<vmem>>, vector<30x256xbf16>
    %c0_12 = arith.constant 0 : index
    %c0_13 = arith.constant 0 : index
    %20 = vector.load %arg9[%c0_12, %c0_13] : memref<256x120xbf16, #tpu.memory_space<vmem>>, vector<256x120xbf16>
    %cst_14 = arith.constant dense<0.000000e+00> : vector<30x120xf32>
    %21 = tpu.matmul %19, %20, %cst_14 {dimension_numbers = #tpu.dot_dimension_numbers<[1], [0], [0], [1], [0, 0, 1, 1], [], []>} : vector<30x256xbf16>, vector<256x120xbf16>, vector<30x120xf32> -> vector<30x120xf32>
    %c0_15 = arith.constant 0 : index
    %c0_16 = arith.constant 0 : index
    %22 = vector.load %arg2[%c0_15, %c0_16] : memref<1x120xf32, #tpu.memory_space<vmem>>, vector<1x120xf32>
    %23 = vector.broadcast %22 : vector<1x120xf32> to vector<30x120xf32>
    %24 = arith.addf %21, %23 : vector<30x120xf32>
    %cst_17 = arith.constant 0.000000e+00 : f32
    %25 = vector.broadcast %cst_17 : f32 to vector<30x120xf32>
    %26 = arith.maximumf %24, %25 : vector<30x120xf32>
    %27 = arith.truncf %26 : vector<30x120xf32> to vector<30x120xbf16>
    %cst_18 = arith.constant 0.000000e+00 : bf16
    %28 = vector.broadcast %cst_18 : bf16 to vector<28x256xbf16>
    %c0_19 = arith.constant 0 : index
    %c0_20 = arith.constant 0 : index
    %29 = vector.load %arg13[%c0_19, %c0_20] : memref<28x256xbf16, #tpu.memory_space<vmem>>, vector<28x256xbf16>
    tpu.vector_store %arg13[%c0_19, %c0_20], %28 {strides = array<i32>} : memref<28x256xbf16, #tpu.memory_space<vmem>>, vector<28x256xbf16>,
    %30 = vector.extract_strided_slice %27 {offsets = [0, 0], sizes = [14, 120], strides = [1, 1]} : vector<30x120xbf16> to vector<14x120xbf16>
    %c0_21 = arith.constant 0 : index
    %c0_22 = arith.constant 0 : index
    %31 = vector.load %arg13[%c0_21, %c0_22] : memref<28x256xbf16, #tpu.memory_space<vmem>>, vector<14x120xbf16>
    tpu.vector_store %arg13[%c0_21, %c0_22], %30 {strides = array<i32>} : memref<28x256xbf16, #tpu.memory_space<vmem>>, vector<14x120xbf16>,
    %32 = vector.extract_strided_slice %27 {offsets = [15, 0], sizes = [14, 120], strides = [1, 1]} : vector<30x120xbf16> to vector<14x120xbf16>
    %c14 = arith.constant 14 : index
    %c0_23 = arith.constant 0 : index
    %33 = vector.load %arg13[%c14, %c0_23] : memref<28x256xbf16, #tpu.memory_space<vmem>>, vector<14x120xbf16>
    tpu.vector_store %arg13[%c14, %c0_23], %32 {strides = array<i32>} : memref<28x256xbf16, #tpu.memory_space<vmem>>, vector<14x120xbf16>,
    %34 = vector.extract_strided_slice %27 {offsets = [1, 0], sizes = [14, 120], strides = [1, 1]} : vector<30x120xbf16> to vector<14x120xbf16>
    %c0_24 = arith.constant 0 : index
    %c128_25 = arith.constant 128 : index
    %35 = vector.load %arg13[%c0_24, %c128_25] : memref<28x256xbf16, #tpu.memory_space<vmem>>, vector<14x120xbf16>
    tpu.vector_store %arg13[%c0_24, %c128_25], %34 {strides = array<i32>} : memref<28x256xbf16, #tpu.memory_space<vmem>>, vector<14x120xbf16>,
    %36 = vector.extract_strided_slice %27 {offsets = [16, 0], sizes = [14, 120], strides = [1, 1]} : vector<30x120xbf16> to vector<14x120xbf16>
    %c14_26 = arith.constant 14 : index
    %c128_27 = arith.constant 128 : index
    %37 = vector.load %arg13[%c14_26, %c128_27] : memref<28x256xbf16, #tpu.memory_space<vmem>>, vector<14x120xbf16>
    tpu.vector_store %arg13[%c14_26, %c128_27], %36 {strides = array<i32>} : memref<28x256xbf16, #tpu.memory_space<vmem>>, vector<14x120xbf16>,
    %c1_i32_28 = arith.constant 1 : i32
    %38 = tpu.memref_slice %arg15[%c1_i32_28] : memref<3x!tpu.dma_semaphore, #tpu.memory_space<semaphore_mem>> -> memref<1x!tpu.dma_semaphore, #tpu.memory_space<semaphore_mem>>
    %39 = tpu.memref_squeeze %38 : memref<1x!tpu.dma_semaphore, #tpu.memory_space<semaphore_mem>> -> memref<!tpu.dma_semaphore, #tpu.memory_space<semaphore_mem>>
    tpu.wait_dma2 semaphore(%39 : memref<!tpu.dma_semaphore, #tpu.memory_space<semaphore_mem>>) src(%arg6 : memref<256x224xbf16, #tpu.memory_space<any>>) dst(%arg10 : memref<256x224xbf16, #tpu.memory_space<vmem>>)
    %c0_29 = arith.constant 0 : index
    %c0_30 = arith.constant 0 : index
    %40 = vector.load %arg13[%c0_29, %c0_30] : memref<28x256xbf16, #tpu.memory_space<vmem>>, vector<28x256xbf16>
    %c0_31 = arith.constant 0 : index
    %c0_32 = arith.constant 0 : index
    %41 = vector.load %arg10[%c0_31, %c0_32] : memref<256x224xbf16, #tpu.memory_space<vmem>>, vector<256x224xbf16>
    %cst_33 = arith.constant dense<0.000000e+00> : vector<28x224xf32>
    %42 = tpu.matmul %40, %41, %cst_33 {dimension_numbers = #tpu.dot_dimension_numbers<[1], [0], [0], [1], [0, 0, 1, 1], [], []>} : vector<28x256xbf16>, vector<256x224xbf16>, vector<28x224xf32> -> vector<28x224xf32>
    %c0_34 = arith.constant 0 : index
    %c0_35 = arith.constant 0 : index
    %43 = vector.load %arg3[%c0_34, %c0_35] : memref<1x224xf32, #tpu.memory_space<vmem>>, vector<1x224xf32>
    %44 = vector.broadcast %43 : vector<1x224xf32> to vector<28x224xf32>
    %45 = arith.addf %42, %44 : vector<28x224xf32>
    %cst_36 = arith.constant 0.000000e+00 : f32
    %46 = vector.broadcast %cst_36 : f32 to vector<28x224xf32>
    %47 = arith.maximumf %45, %46 : vector<28x224xf32>
    %48 = arith.truncf %47 : vector<28x224xf32> to vector<28x224xbf16>
    %cst_37 = arith.constant 0.000000e+00 : bf16
    %49 = vector.broadcast %cst_37 : bf16 to vector<26x512xbf16>
    %c0_38 = arith.constant 0 : index
    %c0_39 = arith.constant 0 : index
    %50 = vector.load %arg14[%c0_38, %c0_39] : memref<26x512xbf16, #tpu.memory_space<vmem>>, vector<26x512xbf16>
    tpu.vector_store %arg14[%c0_38, %c0_39], %49 {strides = array<i32>} : memref<26x512xbf16, #tpu.memory_space<vmem>>, vector<26x512xbf16>,
    %51 = vector.extract_strided_slice %48 {offsets = [0, 0], sizes = [13, 224], strides = [1, 1]} : vector<28x224xbf16> to vector<13x224xbf16>
    %c0_40 = arith.constant 0 : index
    %c0_41 = arith.constant 0 : index
    %52 = vector.load %arg14[%c0_40, %c0_41] : memref<26x512xbf16, #tpu.memory_space<vmem>>, vector<13x224xbf16>
    tpu.vector_store %arg14[%c0_40, %c0_41], %51 {strides = array<i32>} : memref<26x512xbf16, #tpu.memory_space<vmem>>, vector<13x224xbf16>,
    %53 = vector.extract_strided_slice %48 {offsets = [14, 0], sizes = [13, 224], strides = [1, 1]} : vector<28x224xbf16> to vector<13x224xbf16>
    %c13 = arith.constant 13 : index
    %c0_42 = arith.constant 0 : index
    %54 = vector.load %arg14[%c13, %c0_42] : memref<26x512xbf16, #tpu.memory_space<vmem>>, vector<13x224xbf16>
    tpu.vector_store %arg14[%c13, %c0_42], %53 {strides = array<i32>} : memref<26x512xbf16, #tpu.memory_space<vmem>>, vector<13x224xbf16>,
    %55 = vector.extract_strided_slice %48 {offsets = [1, 0], sizes = [13, 224], strides = [1, 1]} : vector<28x224xbf16> to vector<13x224xbf16>
    %c0_43 = arith.constant 0 : index
    %c256 = arith.constant 256 : index
    %56 = vector.load %arg14[%c0_43, %c256] : memref<26x512xbf16, #tpu.memory_space<vmem>>, vector<13x224xbf16>
    tpu.vector_store %arg14[%c0_43, %c256], %55 {strides = array<i32>} : memref<26x512xbf16, #tpu.memory_space<vmem>>, vector<13x224xbf16>,
    %57 = vector.extract_strided_slice %48 {offsets = [15, 0], sizes = [13, 224], strides = [1, 1]} : vector<28x224xbf16> to vector<13x224xbf16>
    %c13_44 = arith.constant 13 : index
    %c256_45 = arith.constant 256 : index
    %58 = vector.load %arg14[%c13_44, %c256_45] : memref<26x512xbf16, #tpu.memory_space<vmem>>, vector<13x224xbf16>
    tpu.vector_store %arg14[%c13_44, %c256_45], %57 {strides = array<i32>} : memref<26x512xbf16, #tpu.memory_space<vmem>>, vector<13x224xbf16>,
    %c2_i32_46 = arith.constant 2 : i32
    %59 = tpu.memref_slice %arg15[%c2_i32_46] : memref<3x!tpu.dma_semaphore, #tpu.memory_space<semaphore_mem>> -> memref<1x!tpu.dma_semaphore, #tpu.memory_space<semaphore_mem>>
    %60 = tpu.memref_squeeze %59 : memref<1x!tpu.dma_semaphore, #tpu.memory_space<semaphore_mem>> -> memref<!tpu.dma_semaphore, #tpu.memory_space<semaphore_mem>>
    tpu.wait_dma2 semaphore(%60 : memref<!tpu.dma_semaphore, #tpu.memory_space<semaphore_mem>>) src(%arg7 : memref<512x416xbf16, #tpu.memory_space<any>>) dst(%arg11 : memref<512x416xbf16, #tpu.memory_space<vmem>>)
    %c0_47 = arith.constant 0 : index
    %c0_48 = arith.constant 0 : index
    %61 = vector.load %arg14[%c0_47, %c0_48] : memref<26x512xbf16, #tpu.memory_space<vmem>>, vector<26x512xbf16>
    %c0_49 = arith.constant 0 : index
    %c0_50 = arith.constant 0 : index
    %62 = vector.load %arg11[%c0_49, %c0_50] : memref<512x416xbf16, #tpu.memory_space<vmem>>, vector<512x416xbf16>
    %cst_51 = arith.constant dense<0.000000e+00> : vector<26x416xf32>
    %63 = tpu.matmul %61, %62, %cst_51 {dimension_numbers = #tpu.dot_dimension_numbers<[1], [0], [0], [1], [0, 0, 1, 1], [], []>} : vector<26x512xbf16>, vector<512x416xbf16>, vector<26x416xf32> -> vector<26x416xf32>
    %c0_52 = arith.constant 0 : index
    %c0_53 = arith.constant 0 : index
    %64 = vector.load %arg4[%c0_52, %c0_53] : memref<1x416xf32, #tpu.memory_space<vmem>>, vector<1x416xf32>
    %65 = vector.broadcast %64 : vector<1x416xf32> to vector<26x416xf32>
    %66 = arith.addf %63, %65 : vector<26x416xf32>
    %cst_54 = arith.constant 0.000000e+00 : f32
    %67 = vector.broadcast %cst_54 : f32 to vector<26x416xf32>
    %68 = arith.maximumf %66, %67 : vector<26x416xf32>
    %c0_55 = arith.constant 0 : index
    %c0_56 = arith.constant 0 : index
    %69 = vector.load %arg8[%c0_55, %c0_56] : memref<26x416xf32, #tpu.memory_space<vmem>>, vector<26x416xf32>
    tpu.vector_store %arg8[%c0_55, %c0_56], %68 {strides = array<i32>} : memref<26x416xf32, #tpu.memory_space<vmem>>, vector<26x416xf32>,
    return
  }
  func.func @transform_0(%arg0: i32) -> (i32, i32) {
    %c0_i32 = arith.constant 0 : i32
    %c0_i32_0 = arith.constant 0 : i32
    %c0_i32_1 = arith.constant 0 : i32
    return %c0_i32, %c0_i32_0 : i32, i32
  }
  func.func @transform_1(%arg0: i32) -> (i32, i32) {
    %c0_i32 = arith.constant 0 : i32
    %c0_i32_0 = arith.constant 0 : i32
    %c0_i32_1 = arith.constant 0 : i32
    return %c0_i32, %c0_i32_0 : i32, i32
  }
  func.func @transform_2(%arg0: i32) -> (i32, i32) {
    %c0_i32 = arith.constant 0 : i32
    %c0_i32_0 = arith.constant 0 : i32
    %c0_i32_1 = arith.constant 0 : i32
    return %c0_i32, %c0_i32_0 : i32, i32
  }
  func.func @transform_3(%arg0: i32) -> (i32, i32) {
    %c0_i32 = arith.constant 0 : i32
    %c0_i32_0 = arith.constant 0 : i32
    %c0_i32_1 = arith.constant 0 : i32
    return %c0_i32, %c0_i32_0 : i32, i32
  }
  func.func @transform_7(%arg0: i32) -> (i32, i32) {
    %c0_i32 = arith.constant 0 : i32
    %c0_i32_0 = arith.constant 0 : i32
    %c0_i32_1 = arith.constant 0 : i32
    return %c0_i32, %c0_i32_0 : i32, i32
  }
}

</mosaic_0001>

<llo_original>
// kernel: conv_unit_forward.1
$region0: #{conv_unit_forward.1}
  #allocation0 [shape = 'u32[]', space=smem, size = 0x4, offset = 0x4, fixed_abs, tag = 'smem constant byte address 0x4 - core index']
  #allocation1 [shape = 'u32[72,128]{1,0:T(1,128)}', space=vmem, size = 0x9000, scoped, tag = 'internal scratch']
  #allocation2 [shape = 'bf16[256,120]{1,0:T(8,128)(2,1)}', space=vmem, size = 0x10000, scoped, tag = 'scratch operand']
  #allocation3 [shape = 'bf16[256,224]{1,0:T(8,128)(2,1)}', space=vmem, size = 0x20000, scoped, tag = 'scratch operand']
  #allocation4 [shape = 'bf16[512,416]{1,0:T(8,128)(2,1)}', space=vmem, size = 0x80000, scoped, tag = 'scratch operand']
  #allocation5 [shape = 'bf16[30,256]{1,0:T(8,128)(2,1)}', space=vmem, size = 0x4000, scoped, tag = 'scratch operand']
  #allocation6 [shape = 'bf16[28,256]{1,0:T(8,128)(2,1)}', space=vmem, size = 0x4000, scoped, tag = 'scratch operand']
  #allocation7 [shape = 'bf16[26,512]{1,0:T(8,128)(2,1)}', space=vmem, size = 0x8000, scoped, tag = 'scratch operand']
  #allocation8 [shape = 's32[3]{0}', space=sflag, size = 0xc, scoped, tag = 'scratch operand']
  #allocation9 [shape = 's32[]', space=sflag, size = 0x4, offset = 0, fixed_abs, tag = 'sflag constant byte address 0x0 - dummy sync flag']
  #allocation10 [shape = 's32[]', space=sflag, size = 0x4, offset = 0, fixed_abs, tag = 'sflag constant byte address 0x0 - dummy sync flag']
  #allocation11 [shape = 's32[]', space=sflag, size = 0x4, offset = 0, fixed_abs, tag = 'sflag constant byte address 0x0 - dummy sync flag']
  %s0 = inlined_call_operand.vmem [shape: bf16[32,64], index: 0, kind: input, shape index: {}]
  %s1 = inlined_call_operand.vmem [shape: f32[1,120], index: 1, kind: input, shape index: {}]
  %s2 = inlined_call_operand.vmem [shape: f32[1,224], index: 2, kind: input, shape index: {}]
  %s3 = inlined_call_operand.vmem [shape: f32[1,416], index: 3, kind: input, shape index: {}]
  %s4 = inlined_call_operand.vmem [shape: bf16[256,120], index: 4, kind: input, shape index: {}]
  %s5 = inlined_call_operand.vmem [shape: bf16[256,224], index: 5, kind: input, shape index: {}]
  %s6 = inlined_call_operand.vmem [shape: bf16[512,416], index: 6, kind: input, shape index: {}]
  %s7 = inlined_call_operand.vmem [shape: f32[26,416], index: 7, kind: output, shape index: {}]
  %s8 = sld [smem:[#allocation0]]
  $region83: #{conv_unit_forward.1} parent=0
    _
  %s10 = ssub.s32 1, %s8
  %s11 = scalar_select 0, %s10, %s8
  // Predicated region
  $region2: #{conv_unit_forward.1} parent=0 // pred_check
    _
  $region3: #{conv_unit_forward.1} parent=0 // pred_check_branch
    %13 = sbr.rel (0) target = $region5
  $region4: #{conv_unit_forward.1} parent=0 // pred_region
    _
  $region5: #{conv_unit_forward.1} parent=0 // pred_fallthru
    _
  // Predicated region
  $region6: #{conv_unit_forward.1} parent=0 // pred_check
    _
  $region7: #{conv_unit_forward.1} parent=0 // pred_check_branch
    %15 = sbr.rel (0) target = $region9
  $region8: #{conv_unit_forward.1} parent=0 // pred_region
    _
  $region9: #{conv_unit_forward.1} parent=0 // pred_fallthru
    _
  // Predicated region
  $region10: #{conv_unit_forward.1} parent=0 // pred_check
    _
  $region11: #{conv_unit_forward.1} parent=0 // pred_check_branch
    %17 = sbr.rel (0) target = $region13
  $region12: #{conv_unit_forward.1} parent=0 // pred_region
    _
  $region13: #{conv_unit_forward.1} parent=0 // pred_fallthru
    _
  // Predicated region
  $region14: #{conv_unit_forward.1} parent=0 // pred_check
    _
  $region15: #{conv_unit_forward.1} parent=0 // pred_check_branch
    %19 = sbr.rel (0) target = $region17
  $region16: #{conv_unit_forward.1} parent=0 // pred_region
    _
  $region17: #{conv_unit_forward.1} parent=0 // pred_fallthru
    _
  // Predicated region
  $region18: #{conv_unit_forward.1} parent=0 // pred_check
    _
  $region19: #{conv_unit_forward.1} parent=0 // pred_check_branch
    %22 = sbr.rel (0) target = $region21
  $region20: #{conv_unit_forward.1} parent=0 // pred_region
    loop: start=0, step=1, limit=1
    $region22: #{conv_unit_forward.1} parent=20 // loop_pre_header
      _
    $region23: #{conv_unit_forward.1} parent=20 // loop_header
      %s24 = sphi 0, %s28
      %p25 = scmp.ge.s32.totalorder %s24, 1
      %s29 = sphi %s4, %s4
      %s30 = sphi [#allocation2], [#allocation2]
    $region24: #{conv_unit_forward.1} parent=20 // loop_header_branch
      %27 = sbr.rel (%p25) target = $region28
    $region25: #{conv_unit_forward.1} parent=20 // loop_body
      %v31 = vld [vmem:[%s29] sm:$0xff]
      %32 = vst [vmem:[%s30] sm:$0xff] %v31
      %v33 = vld [vmem:[%s29 + $0x8] sm:$0xff]
      %34 = vst [vmem:[%s30 + $0x8] sm:$0xff] %v33
      %v35 = vld [vmem:[%s29 + $0x10] sm:$0xff]
      %36 = vst [vmem:[%s30 + $0x10] sm:$0xff] %v35
      %v37 = vld [vmem:[%s29 + $0x18] sm:$0xff]
      %38 = vst [vmem:[%s30 + $0x18] sm:$0xff] %v37
      %v39 = vld [vmem:[%s29 + $0x20] sm:$0xff]
      %40 = vst [vmem:[%s30 + $0x20] sm:$0xff] %v39
      %v41 = vld [vmem:[%s29 + $0x28] sm:$0xff]
      %42 = vst [vmem:[%s30 + $0x28] sm:$0xff] %v41
      %v43 = vld [vmem:[%s29 + $0x30] sm:$0xff]
      %44 = vst [vmem:[%s30 + $0x30] sm:$0xff] %v43
      %v45 = vld [vmem:[%s29 + $0x38] sm:$0xff]
      %46 = vst [vmem:[%s30 + $0x38] sm:$0xff] %v45
      %v47 = vld [vmem:[%s29 + $0x40] sm:$0xff]
      %48 = vst [vmem:[%s30 + $0x40] sm:$0xff] %v47
      %v49 = vld [vmem:[%s29 + $0x48] sm:$0xff]
      %50 = vst [vmem:[%s30 + $0x48] sm:$0xff] %v49
      %v51 = vld [vmem:[%s29 + $0x50] sm:$0xff]
      %52 = vst [vmem:[%s30 + $0x50] sm:$0xff] %v51
      %v53 = vld [vmem:[%s29 + $0x58] sm:$0xff]
      %54 = vst [vmem:[%s30 + $0x58] sm:$0xff] %v53
      %v55 = vld [vmem:[%s29 + $0x60] sm:$0xff]
      %56 = vst [vmem:[%s30 + $0x60] sm:$0xff] %v55
      %v57 = vld [vmem:[%s29 + $0x68] sm:$0xff]
      %58 = vst [vmem:[%s30 + $0x68] sm:$0xff] %v57
      %v59 = vld [vmem:[%s29 + $0x70] sm:$0xff]
      %60 = vst [vmem:[%s30 + $0x70] sm:$0xff] %v59
      %v61 = vld [vmem:[%s29 + $0x78] sm:$0xff]
      %62 = vst [vmem:[%s30 + $0x78] sm:$0xff] %v61
    $region26: #{conv_unit_forward.1} parent=20 // loop_footer
      %s28 = sadd.s32 1, %s24
    $region27: #{conv_unit_forward.1} parent=20 // loop_footer_branch
      %23 = sbr.rel target = $region23
    $region28: #{conv_unit_forward.1} parent=20 // loop_exit
      _
  $region21: #{conv_unit_forward.1} parent=0 // pred_fallthru
    _
  // Predicated region
  $region29: #{conv_unit_forward.1} parent=0 // pred_check
    _
  $region30: #{conv_unit_forward.1} parent=0 // pred_check_branch
    %64 = sbr.rel target = $region32
  $region31: #{conv_unit_forward.1} parent=0 // pred_region
    _
  $region32: #{conv_unit_forward.1} parent=0 // pred_fallthru
    _
  // Predicated region
  $region33: #{conv_unit_forward.1} parent=0 // pred_check
    _
  $region34: #{conv_unit_forward.1} parent=0 // pred_check_branch
    %67 = sbr.rel (0) target = $region36
  $region35: #{conv_unit_forward.1} parent=0 // pred_region
    %68 = vsyncadd [#allocation8], 2048
  $region36: #{conv_unit_forward.1} parent=0 // pred_fallthru
    _
  %s69 = scalar_lea.sflag [#allocation8], 1
  // Predicated region
  $region37: #{conv_unit_forward.1} parent=0 // pred_check
    _
  $region38: #{conv_unit_forward.1} parent=0 // pred_check_branch
    %71 = sbr.rel (0) target = $region40
  $region39: #{conv_unit_forward.1} parent=0 // pred_region
    loop: start=0, step=1, limit=1
    $region41: #{conv_unit_forward.1} parent=39 // loop_pre_header
      _
    $region42: #{conv_unit_forward.1} parent=39 // loop_header
      %s73 = sphi 0, %s77
      %p74 = scmp.ge.s32.totalorder %s73, 1
      %s78 = sphi %s5, %s5
      %s79 = sphi [#allocation3], [#allocation3]
    $region43: #{conv_unit_forward.1} parent=39 // loop_header_branch
      %76 = sbr.rel (%p74) target = $region47
    $region44: #{conv_unit_forward.1} parent=39 // loop_body
      %v80 = vld [vmem:[%s78] sm:$0xff]
      %81 = vst [vmem:[%s79] sm:$0xff] %v80
      %v82 = vld [vmem:[%s78 + $0x8] sm:$0xff]
      %83 = vst [vmem:[%s79 + $0x8] sm:$0xff] %v82
      %v84 = vld [vmem:[%s78 + $0x10] sm:$0xff]
      %85 = vst [vmem:[%s79 + $0x10] sm:$0xff] %v84
      %v86 = vld [vmem:[%s78 + $0x18] sm:$0xff]
      %87 = vst [vmem:[%s79 + $0x18] sm:$0xff] %v86
      %v88 = vld [vmem:[%s78 + $0x20] sm:$0xff]
      %89 = vst [vmem:[%s79 + $0x20] sm:$0xff] %v88
      %v90 = vld [vmem:[%s78 + $0x28] sm:$0xff]
      %91 = vst [vmem:[%s79 + $0x28] sm:$0xff] %v90
      %v92 = vld [vmem:[%s78 + $0x30] sm:$0xff]
      %93 = vst [vmem:[%s79 + $0x30] sm:$0xff] %v92
      %v94 = vld [vmem:[%s78 + $0x38] sm:$0xff]
      %95 = vst [vmem:[%s79 + $0x38] sm:$0xff] %v94
      %v96 = vld [vmem:[%s78 + $0x40] sm:$0xff]
      %97 = vst [vmem:[%s79 + $0x40] sm:$0xff] %v96
      %v98 = vld [vmem:[%s78 + $0x48] sm:$0xff]
      %99 = vst [vmem:[%s79 + $0x48] sm:$0xff] %v98
      %v100 = vld [vmem:[%s78 + $0x50] sm:$0xff]
      %101 = vst [vmem:[%s79 + $0x50] sm:$0xff] %v100
      %v102 = vld [vmem:[%s78 + $0x58] sm:$0xff]
      %103 = vst [vmem:[%s79 + $0x58] sm:$0xff] %v102
      %v104 = vld [vmem:[%s78 + $0x60] sm:$0xff]
      %105 = vst [vmem:[%s79 + $0x60] sm:$0xff] %v104
      %v106 = vld [vmem:[%s78 + $0x68] sm:$0xff]
      %107 = vst [vmem:[%s79 + $0x68] sm:$0xff] %v106
      %v108 = vld [vmem:[%s78 + $0x70] sm:$0xff]
      %109 = vst [vmem:[%s79 + $0x70] sm:$0xff] %v108
      %v110 = vld [vmem:[%s78 + $0x78] sm:$0xff]
      %111 = vst [vmem:[%s79 + $0x78] sm:$0xff] %v110
      %v112 = vld [vmem:[%s78 + $0x80] sm:$0xff]
      %113 = vst [vmem:[%s79 + $0x80] sm:$0xff] %v112
      %v114 = vld [vmem:[%s78 + $0x88] sm:$0xff]
      %115 = vst [vmem:[%s79 + $0x88] sm:$0xff] %v114
      %v116 = vld [vmem:[%s78 + $0x90] sm:$0xff]
      %117 = vst [vmem:[%s79 + $0x90] sm:$0xff] %v116
      %v118 = vld [vmem:[%s78 + $0x98] sm:$0xff]
      %119 = vst [vmem:[%s79 + $0x98] sm:$0xff] %v118
      %v120 = vld [vmem:[%s78 + $0xa0] sm:$0xff]
      %121 = vst [vmem:[%s79 + $0xa0] sm:$0xff] %v120
      %v122 = vld [vmem:[%s78 + $0xa8] sm:$0xff]
      %123 = vst [vmem:[%s79 + $0xa8] sm:$0xff] %v122
      %v124 = vld [vmem:[%s78 + $0xb0] sm:$0xff]
      %125 = vst [vmem:[%s79 + $0xb0] sm:$0xff] %v124
      %v126 = vld [vmem:[%s78 + $0xb8] sm:$0xff]
      %127 = vst [vmem:[%s79 + $0xb8] sm:$0xff] %v126
      %v128 = vld [vmem:[%s78 + $0xc0] sm:$0xff]
      %129 = vst [vmem:[%s79 + $0xc0] sm:$0xff] %v128
      %v130 = vld [vmem:[%s78 + $0xc8] sm:$0xff]
      %131 = vst [vmem:[%s79 + $0xc8] sm:$0xff] %v130
      %v132 = vld [vmem:[%s78 + $0xd0] sm:$0xff]
      %133 = vst [vmem:[%s79 + $0xd0] sm:$0xff] %v132
      %v134 = vld [vmem:[%s78 + $0xd8] sm:$0xff]
      %135 = vst [vmem:[%s79 + $0xd8] sm:$0xff] %v134
      %v136 = vld [vmem:[%s78 + $0xe0] sm:$0xff]
      %137 = vst [vmem:[%s79 + $0xe0] sm:$0xff] %v136
      %v138 = vld [vmem:[%s78 + $0xe8] sm:$0xff]
      %139 = vst [vmem:[%s79 + $0xe8] sm:$0xff] %v138
      %v140 = vld [vmem:[%s78 + $0xf0] sm:$0xff]
      %141 = vst [vmem:[%s79 + $0xf0] sm:$0xff] %v140
      %v142 = vld [vmem:[%s78 + $0xf8] sm:$0xff]
      %143 = vst [vmem:[%s79 + $0xf8] sm:$0xff] %v142
    $region45: #{conv_unit_forward.1} parent=39 // loop_footer
      %s77 = sadd.s32 1, %s73
    $region46: #{conv_unit_forward.1} parent=39 // loop_footer_branch
      %72 = sbr.rel target = $region42
    $region47: #{conv_unit_forward.1} parent=39 // loop_exit
      _
  $region40: #{conv_unit_forward.1} parent=0 // pred_fallthru
    _
  // Predicated region
  $region48: #{conv_unit_forward.1} parent=0 // pred_check
    _
  $region49: #{conv_unit_forward.1} parent=0 // pred_check_branch
    %145 = sbr.rel target = $region51
  $region50: #{conv_unit_forward.1} parent=0 // pred_region
    _
  $region51: #{conv_unit_forward.1} parent=0 // pred_fallthru
    _
  // Predicated region
  $region52: #{conv_unit_forward.1} parent=0 // pred_check
    _
  $region53: #{conv_unit_forward.1} parent=0 // pred_check_branch
    %148 = sbr.rel (0) target = $region55
  $region54: #{conv_unit_forward.1} parent=0 // pred_region
    %149 = vsyncadd %s69, 4096
  $region55: #{conv_unit_forward.1} parent=0 // pred_fallthru
    _
  %s150 = scalar_lea.sflag [#allocation8], 2
  // Predicated region
  $region56: #{conv_unit_forward.1} parent=0 // pred_check
    _
  $region57: #{conv_unit_forward.1} parent=0 // pred_check_branch
    %152 = sbr.rel (0) target = $region59
  $region58: #{conv_unit_forward.1} parent=0 // pred_region
    loop: start=0, step=1, limit=1
    $region60: #{conv_unit_forward.1} parent=58 // loop_pre_header
      _
    $region61: #{conv_unit_forward.1} parent=58 // loop_header
      %s154 = sphi 0, %s158
      %p155 = scmp.ge.s32.totalorder %s154, 1
      %s159 = sphi %s6, %s6
      %s160 = sphi [#allocation4], [#allocation4]
    $region62: #{conv_unit_forward.1} parent=58 // loop_header_branch
      %157 = sbr.rel (%p155) target = $region66
    $region63: #{conv_unit_forward.1} parent=58 // loop_body
      %v161 = vld [vmem:[%s159] sm:$0xff]
      %162 = vst [vmem:[%s160] sm:$0xff] %v161
      %v163 = vld [vmem:[%s159 + $0x8] sm:$0xff]
      %164 = vst [vmem:[%s160 + $0x8] sm:$0xff] %v163
      %v165 = vld [vmem:[%s159 + $0x10] sm:$0xff]
      %166 = vst [vmem:[%s160 + $0x10] sm:$0xff] %v165
      %v167 = vld [vmem:[%s159 + $0x18] sm:$0xff]
      %168 = vst [vmem:[%s160 + $0x18] sm:$0xff] %v167
      %v169 = vld [vmem:[%s159 + $0x20] sm:$0xff]
      %170 = vst [vmem:[%s160 + $0x20] sm:$0xff] %v169
      %v171 = vld [vmem:[%s159 + $0x28] sm:$0xff]
      %172 = vst [vmem:[%s160 + $0x28] sm:$0xff] %v171
      %v173 = vld [vmem:[%s159 + $0x30] sm:$0xff]
      %174 = vst [vmem:[%s160 + $0x30] sm:$0xff] %v173
      %v175 = vld [vmem:[%s159 + $0x38] sm:$0xff]
      %176 = vst [vmem:[%s160 + $0x38] sm:$0xff] %v175
      %v177 = vld [vmem:[%s159 + $0x40] sm:$0xff]
      %178 = vst [vmem:[%s160 + $0x40] sm:$0xff] %v177
      %v179 = vld [vmem:[%s159 + $0x48] sm:$0xff]
      %180 = vst [vmem:[%s160 + $0x48] sm:$0xff] %v179
      %v181 = vld [vmem:[%s159 + $0x50] sm:$0xff]
      %182 = vst [vmem:[%s160 + $0x50] sm:$0xff] %v181
      %v183 = vld [vmem:[%s159 + $0x58] sm:$0xff]
      %184 = vst [vmem:[%s160 + $0x58] sm:$0xff] %v183
      %v185 = vld [vmem:[%s159 + $0x60] sm:$0xff]
      %186 = vst [vmem:[%s160 + $0x60] sm:$0xff] %v185
      %v187 = vld [vmem:[%s159 + $0x68] sm:$0xff]
      %188 = vst [vmem:[%s160 + $0x68] sm:$0xff] %v187
      %v189 = vld [vmem:[%s159 + $0x70] sm:$0xff]
      %190 = vst [vmem:[%s160 + $0x70] sm:$0xff] %v189
      %v191 = vld [vmem:[%s159 + $0x78] sm:$0xff]
      %192 = vst [vmem:[%s160 + $0x78] sm:$0xff] %v191
      %v193 = vld [vmem:[%s159 + $0x80] sm:$0xff]
      %194 = vst [vmem:[%s160 + $0x80] sm:$0xff] %v193
      %v195 = vld [vmem:[%s159 + $0x88] sm:$0xff]
      %196 = vst [vmem:[%s160 + $0x88] sm:$0xff] %v195
      %v197 = vld [vmem:[%s159 + $0x90] sm:$0xff]
      %198 = vst [vmem:[%s160 + $0x90] sm:$0xff] %v197
      %v199 = vld [vmem:[%s159 + $0x98] sm:$0xff]
      %200 = vst [vmem:[%s160 + $0x98] sm:$0xff] %v199
      %v201 = vld [vmem:[%s159 + $0xa0] sm:$0xff]
      %202 = vst [vmem:[%s160 + $0xa0] sm:$0xff] %v201
      %v203 = vld [vmem:[%s159 + $0xa8] sm:$0xff]
      %204 = vst [vmem:[%s160 + $0xa8] sm:$0xff] %v203
      %v205 = vld [vmem:[%s159 + $0xb0] sm:$0xff]
      %206 = vst [vmem:[%s160 + $0xb0] sm:$0xff] %v205
      %v207 = vld [vmem:[%s159 + $0xb8] sm:$0xff]
      %208 = vst [vmem:[%s160 + $0xb8] sm:$0xff] %v207
      %v209 = vld [vmem:[%s159 + $0xc0] sm:$0xff]
      %210 = vst [vmem:[%s160 + $0xc0] sm:$0xff] %v209
      %v211 = vld [vmem:[%s159 + $0xc8] sm:$0xff]
      %212 = vst [vmem:[%s160 + $0xc8] sm:$0xff] %v211
      %v213 = vld [vmem:[%s159 + $0xd0] sm:$0xff]
      %214 = vst [vmem:[%s160 + $0xd0] sm:$0xff] %v213
      %v215 = vld [vmem:[%s159 + $0xd8] sm:$0xff]
      %216 = vst [vmem:[%s160 + $0xd8] sm:$0xff] %v215
      %v217 = vld [vmem:[%s159 + $0xe0] sm:$0xff]
      %218 = vst [vmem:[%s160 + $0xe0] sm:$0xff] %v217
      %v219 = vld [vmem:[%s159 + $0xe8] sm:$0xff]
      %220 = vst [vmem:[%s160 + $0xe8] sm:$0xff] %v219
      %v221 = vld [vmem:[%s159 + $0xf0] sm:$0xff]
      %222 = vst [vmem:[%s160 + $0xf0] sm:$0xff] %v221
      %v223 = vld [vmem:[%s159 + $0xf8] sm:$0xff]
      %224 = vst [vmem:[%s160 + $0xf8] sm:$0xff] %v223
      %v225 = vld [vmem:[%s159 + $0x100] sm:$0xff]
      %226 = vst [vmem:[%s160 + $0x100] sm:$0xff] %v225
      %v227 = vld [vmem:[%s159 + $0x108] sm:$0xff]
      %228 = vst [vmem:[%s160 + $0x108] sm:$0xff] %v227
      %v229 = vld [vmem:[%s159 + $0x110] sm:$0xff]
      %230 = vst [vmem:[%s160 + $0x110] sm:$0xff] %v229
      %v231 = vld [vmem:[%s159 + $0x118] sm:$0xff]
      %232 = vst [vmem:[%s160 + $0x118] sm:$0xff] %v231
      %v233 = vld [vmem:[%s159 + $0x120] sm:$0xff]
      %234 = vst [vmem:[%s160 + $0x120] sm:$0xff] %v233
      %v235 = vld [vmem:[%s159 + $0x128] sm:$0xff]
      %236 = vst [vmem:[%s160 + $0x128] sm:$0xff] %v235
      %v237 = vld [vmem:[%s159 + $0x130] sm:$0xff]
      %238 = vst [vmem:[%s160 + $0x130] sm:$0xff] %v237
      %v239 = vld [vmem:[%s159 + $0x138] sm:$0xff]
      %240 = vst [vmem:[%s160 + $0x138] sm:$0xff] %v239
      %v241 = vld [vmem:[%s159 + $0x140] sm:$0xff]
      %242 = vst [vmem:[%s160 + $0x140] sm:$0xff] %v241
      %v243 = vld [vmem:[%s159 + $0x148] sm:$0xff]
      %244 = vst [vmem:[%s160 + $0x148] sm:$0xff] %v243
      %v245 = vld [vmem:[%s159 + $0x150] sm:$0xff]
      %246 = vst [vmem:[%s160 + $0x150] sm:$0xff] %v245
      %v247 = vld [vmem:[%s159 + $0x158] sm:$0xff]
      %248 = vst [vmem:[%s160 + $0x158] sm:$0xff] %v247
      %v249 = vld [vmem:[%s159 + $0x160] sm:$0xff]
      %250 = vst [vmem:[%s160 + $0x160] sm:$0xff] %v249
      %v251 = vld [vmem:[%s159 + $0x168] sm:$0xff]
      %252 = vst [vmem:[%s160 + $0x168] sm:$0xff] %v251
      %v253 = vld [vmem:[%s159 + $0x170] sm:$0xff]
      %254 = vst [vmem:[%s160 + $0x170] sm:$0xff] %v253
      %v255 = vld [vmem:[%s159 + $0x178] sm:$0xff]
      %256 = vst [vmem:[%s160 + $0x178] sm:$0xff] %v255
      %v257 = vld [vmem:[%s159 + $0x180] sm:$0xff]
      %258 = vst [vmem:[%s160 + $0x180] sm:$0xff] %v257
      %v259 = vld [vmem:[%s159 + $0x188] sm:$0xff]
      %260 = vst [vmem:[%s160 + $0x188] sm:$0xff] %v259
      %v261 = vld [vmem:[%s159 + $0x190] sm:$0xff]
      %262 = vst [vmem:[%s160 + $0x190] sm:$0xff] %v261
      %v263 = vld [vmem:[%s159 + $0x198] sm:$0xff]
      %264 = vst [vmem:[%s160 + $0x198] sm:$0xff] %v263
      %v265 = vld [vmem:[%s159 + $0x1a0] sm:$0xff]
      %266 = vst [vmem:[%s160 + $0x1a0] sm:$0xff] %v265
      %v267 = vld [vmem:[%s159 + $0x1a8] sm:$0xff]
      %268 = vst [vmem:[%s160 + $0x1a8] sm:$0xff] %v267
      %v269 = vld [vmem:[%s159 + $0x1b0] sm:$0xff]
      %270 = vst [vmem:[%s160 + $0x1b0] sm:$0xff] %v269
      %v271 = vld [vmem:[%s159 + $0x1b8] sm:$0xff]
      %272 = vst [vmem:[%s160 + $0x1b8] sm:$0xff] %v271
      %v273 = vld [vmem:[%s159 + $0x1c0] sm:$0xff]
      %274 = vst [vmem:[%s160 + $0x1c0] sm:$0xff] %v273
      %v275 = vld [vmem:[%s159 + $0x1c8] sm:$0xff]
      %276 = vst [vmem:[%s160 + $0x1c8] sm:$0xff] %v275
      %v277 = vld [vmem:[%s159 + $0x1d0] sm:$0xff]
      %278 = vst [vmem:[%s160 + $0x1d0] sm:$0xff] %v277
      %v279 = vld [vmem:[%s159 + $0x1d8] sm:$0xff]
      %280 = vst [vmem:[%s160 + $0x1d8] sm:$0xff] %v279
      %v281 = vld [vmem:[%s159 + $0x1e0] sm:$0xff]
      %282 = vst [vmem:[%s160 + $0x1e0] sm:$0xff] %v281
      %v283 = vld [vmem:[%s159 + $0x1e8] sm:$0xff]
      %284 = vst [vmem:[%s160 + $0x1e8] sm:$0xff] %v283
      %v285 = vld [vmem:[%s159 + $0x1f0] sm:$0xff]
      %286 = vst [vmem:[%s160 + $0x1f0] sm:$0xff] %v285
      %v287 = vld [vmem:[%s159 + $0x1f8] sm:$0xff]
      %288 = vst [vmem:[%s160 + $0x1f8] sm:$0xff] %v287
      %v289 = vld [vmem:[%s159 + $0x200] sm:$0xff]
      %290 = vst [vmem:[%s160 + $0x200] sm:$0xff] %v289
      %v291 = vld [vmem:[%s159 + $0x208] sm:$0xff]
      %292 = vst [vmem:[%s160 + $0x208] sm:$0xff] %v291
      %v293 = vld [vmem:[%s159 + $0x210] sm:$0xff]
      %294 = vst [vmem:[%s160 + $0x210] sm:$0xff] %v293
      %v295 = vld [vmem:[%s159 + $0x218] sm:$0xff]
      %296 = vst [vmem:[%s160 + $0x218] sm:$0xff] %v295
      %v297 = vld [vmem:[%s159 + $0x220] sm:$0xff]
      %298 = vst [vmem:[%s160 + $0x220] sm:$0xff] %v297
      %v299 = vld [vmem:[%s159 + $0x228] sm:$0xff]
      %300 = vst [vmem:[%s160 + $0x228] sm:$0xff] %v299
      %v301 = vld [vmem:[%s159 + $0x230] sm:$0xff]
      %302 = vst [vmem:[%s160 + $0x230] sm:$0xff] %v301
      %v303 = vld [vmem:[%s159 + $0x238] sm:$0xff]
      %304 = vst [vmem:[%s160 + $0x238] sm:$0xff] %v303
      %v305 = vld [vmem:[%s159 + $0x240] sm:$0xff]
      %306 = vst [vmem:[%s160 + $0x240] sm:$0xff] %v305
      %v307 = vld [vmem:[%s159 + $0x248] sm:$0xff]
      %308 = vst [vmem:[%s160 + $0x248] sm:$0xff] %v307
      %v309 = vld [vmem:[%s159 + $0x250] sm:$0xff]
      %310 = vst [vmem:[%s160 + $0x250] sm:$0xff] %v309
      %v311 = vld [vmem:[%s159 + $0x258] sm:$0xff]
      %312 = vst [vmem:[%s160 + $0x258] sm:$0xff] %v311
      %v313 = vld [vmem:[%s159 + $0x260] sm:$0xff]
      %314 = vst [vmem:[%s160 + $0x260] sm:$0xff] %v313
      %v315 = vld [vmem:[%s159 + $0x268] sm:$0xff]
      %316 = vst [vmem:[%s160 + $0x268] sm:$0xff] %v315
      %v317 = vld [vmem:[%s159 + $0x270] sm:$0xff]
      %318 = vst [vmem:[%s160 + $0x270] sm:$0xff] %v317
      %v319 = vld [vmem:[%s159 + $0x278] sm:$0xff]
      %320 = vst [vmem:[%s160 + $0x278] sm:$0xff] %v319
      %v321 = vld [vmem:[%s159 + $0x280] sm:$0xff]
      %322 = vst [vmem:[%s160 + $0x280] sm:$0xff] %v321
      %v323 = vld [vmem:[%s159 + $0x288] sm:$0xff]
      %324 = vst [vmem:[%s160 + $0x288] sm:$0xff] %v323
      %v325 = vld [vmem:[%s159 + $0x290] sm:$0xff]
      %326 = vst [vmem:[%s160 + $0x290] sm:$0xff] %v325
      %v327 = vld [vmem:[%s159 + $0x298] sm:$0xff]
      %328 = vst [vmem:[%s160 + $0x298] sm:$0xff] %v327
      %v329 = vld [vmem:[%s159 + $0x2a0] sm:$0xff]
      %330 = vst [vmem:[%s160 + $0x2a0] sm:$0xff] %v329
      %v331 = vld [vmem:[%s159 + $0x2a8] sm:$0xff]
      %332 = vst [vmem:[%s160 + $0x2a8] sm:$0xff] %v331
      %v333 = vld [vmem:[%s159 + $0x2b0] sm:$0xff]
      %334 = vst [vmem:[%s160 + $0x2b0] sm:$0xff] %v333
      %v335 = vld [vmem:[%s159 + $0x2b8] sm:$0xff]
      %336 = vst [vmem:[%s160 + $0x2b8] sm:$0xff] %v335
      %v337 = vld [vmem:[%s159 + $0x2c0] sm:$0xff]
      %338 = vst [vmem:[%s160 + $0x2c0] sm:$0xff] %v337
      %v339 = vld [vmem:[%s159 + $0x2c8] sm:$0xff]
      %340 = vst [vmem:[%s160 + $0x2c8] sm:$0xff] %v339
      %v341 = vld [vmem:[%s159 + $0x2d0] sm:$0xff]
      %342 = vst [vmem:[%s160 + $0x2d0] sm:$0xff] %v341
      %v343 = vld [vmem:[%s159 + $0x2d8] sm:$0xff]
      %344 = vst [vmem:[%s160 + $0x2d8] sm:$0xff] %v343
      %v345 = vld [vmem:[%s159 + $0x2e0] sm:$0xff]
      %346 = vst [vmem:[%s160 + $0x2e0] sm:$0xff] %v345
      %v347 = vld [vmem:[%s159 + $0x2e8] sm:$0xff]
      %348 = vst [vmem:[%s160 + $0x2e8] sm:$0xff] %v347
      %v349 = vld [vmem:[%s159 + $0x2f0] sm:$0xff]
      %350 = vst [vmem:[%s160 + $0x2f0] sm:$0xff] %v349
      %v351 = vld [vmem:[%s159 + $0x2f8] sm:$0xff]
      %352 = vst [vmem:[%s160 + $0x2f8] sm:$0xff] %v351
      %v353 = vld [vmem:[%s159 + $0x300] sm:$0xff]
      %354 = vst [vmem:[%s160 + $0x300] sm:$0xff] %v353
      %v355 = vld [vmem:[%s159 + $0x308] sm:$0xff]
      %356 = vst [vmem:[%s160 + $0x308] sm:$0xff] %v355
      %v357 = vld [vmem:[%s159 + $0x310] sm:$0xff]
      %358 = vst [vmem:[%s160 + $0x310] sm:$0xff] %v357
      %v359 = vld [vmem:[%s159 + $0x318] sm:$0xff]
      %360 = vst [vmem:[%s160 + $0x318] sm:$0xff] %v359
      %v361 = vld [vmem:[%s159 + $0x320] sm:$0xff]
      %362 = vst [vmem:[%s160 + $0x320] sm:$0xff] %v361
      %v363 = vld [vmem:[%s159 + $0x328] sm:$0xff]
      %364 = vst [vmem:[%s160 + $0x328] sm:$0xff] %v363
      %v365 = vld [vmem:[%s159 + $0x330] sm:$0xff]
      %366 = vst [vmem:[%s160 + $0x330] sm:$0xff] %v365
      %v367 = vld [vmem:[%s159 + $0x338] sm:$0xff]
      %368 = vst [vmem:[%s160 + $0x338] sm:$0xff] %v367
      %v369 = vld [vmem:[%s159 + $0x340] sm:$0xff]
      %370 = vst [vmem:[%s160 + $0x340] sm:$0xff] %v369
      %v371 = vld [vmem:[%s159 + $0x348] sm:$0xff]
      %372 = vst [vmem:[%s160 + $0x348] sm:$0xff] %v371
      %v373 = vld [vmem:[%s159 + $0x350] sm:$0xff]
      %374 = vst [vmem:[%s160 + $0x350] sm:$0xff] %v373
      %v375 = vld [vmem:[%s159 + $0x358] sm:$0xff]
      %376 = vst [vmem:[%s160 + $0x358] sm:$0xff] %v375
      %v377 = vld [vmem:[%s159 + $0x360] sm:$0xff]
      %378 = vst [vmem:[%s160 + $0x360] sm:$0xff] %v377
      %v379 = vld [vmem:[%s159 + $0x368] sm:$0xff]
      %380 = vst [vmem:[%s160 + $0x368] sm:$0xff] %v379
      %v381 = vld [vmem:[%s159 + $0x370] sm:$0xff]
      %382 = vst [vmem:[%s160 + $0x370] sm:$0xff] %v381
      %v383 = vld [vmem:[%s159 + $0x378] sm:$0xff]
      %384 = vst [vmem:[%s160 + $0x378] sm:$0xff] %v383
      %v385 = vld [vmem:[%s159 + $0x380] sm:$0xff]
      %386 = vst [vmem:[%s160 + $0x380] sm:$0xff] %v385
      %v387 = vld [vmem:[%s159 + $0x388] sm:$0xff]
      %388 = vst [vmem:[%s160 + $0x388] sm:$0xff] %v387
      %v389 = vld [vmem:[%s159 + $0x390] sm:$0xff]
      %390 = vst [vmem:[%s160 + $0x390] sm:$0xff] %v389
      %v391 = vld [vmem:[%s159 + $0x398] sm:$0xff]
      %392 = vst [vmem:[%s160 + $0x398] sm:$0xff] %v391
      %v393 = vld [vmem:[%s159 + $0x3a0] sm:$0xff]
      %394 = vst [vmem:[%s160 + $0x3a0] sm:$0xff] %v393
      %v395 = vld [vmem:[%s159 + $0x3a8] sm:$0xff]
      %396 = vst [vmem:[%s160 + $0x3a8] sm:$0xff] %v395
      %v397 = vld [vmem:[%s159 + $0x3b0] sm:$0xff]
      %398 = vst [vmem:[%s160 + $0x3b0] sm:$0xff] %v397
      %v399 = vld [vmem:[%s159 + $0x3b8] sm:$0xff]
      %400 = vst [vmem:[%s160 + $0x3b8] sm:$0xff] %v399
      %v401 = vld [vmem:[%s159 + $0x3c0] sm:$0xff]
      %402 = vst [vmem:[%s160 + $0x3c0] sm:$0xff] %v401
      %v403 = vld [vmem:[%s159 + $0x3c8] sm:$0xff]
      %404 = vst [vmem:[%s160 + $0x3c8] sm:$0xff] %v403
      %v405 = vld [vmem:[%s159 + $0x3d0] sm:$0xff]
      %406 = vst [vmem:[%s160 + $0x3d0] sm:$0xff] %v405
      %v407 = vld [vmem:[%s159 + $0x3d8] sm:$0xff]
      %408 = vst [vmem:[%s160 + $0x3d8] sm:$0xff] %v407
      %v409 = vld [vmem:[%s159 + $0x3e0] sm:$0xff]
      %410 = vst [vmem:[%s160 + $0x3e0] sm:$0xff] %v409
      %v411 = vld [vmem:[%s159 + $0x3e8] sm:$0xff]
      %412 = vst [vmem:[%s160 + $0x3e8] sm:$0xff] %v411
      %v413 = vld [vmem:[%s159 + $0x3f0] sm:$0xff]
      %414 = vst [vmem:[%s160 + $0x3f0] sm:$0xff] %v413
      %v415 = vld [vmem:[%s159 + $0x3f8] sm:$0xff]
      %416 = vst [vmem:[%s160 + $0x3f8] sm:$0xff] %v415
    $region64: #{conv_unit_forward.1} parent=58 // loop_footer
      %s158 = sadd.s32 1, %s154
    $region65: #{conv_unit_forward.1} parent=58 // loop_footer_branch
      %153 = sbr.rel target = $region61
    $region66: #{conv_unit_forward.1} parent=58 // loop_exit
      _
  $region59: #{conv_unit_forward.1} parent=0 // pred_fallthru
    _
  // Predicated region
  $region67: #{conv_unit_forward.1} parent=0 // pred_check
    _
  $region68: #{conv_unit_forward.1} parent=0 // pred_check_branch
    %418 = sbr.rel target = $region70
  $region69: #{conv_unit_forward.1} parent=0 // pred_region
    _
  $region70: #{conv_unit_forward.1} parent=0 // pred_fallthru
    _
  // Predicated region
  $region71: #{conv_unit_forward.1} parent=0 // pred_check
    _
  $region72: #{conv_unit_forward.1} parent=0 // pred_check_branch
    %421 = sbr.rel (0) target = $region74
  $region73: #{conv_unit_forward.1} parent=0 // pred_region
    %422 = vsyncadd %s150, 16384
  $region74: #{conv_unit_forward.1} parent=0 // pred_fallthru
    _
  %v423 = vld [vmem:[%s0] sm:$0xf]
  %v424 = vld [vmem:[%s0 + $0x4] sm:$0xf]
  %v425 = vld [vmem:[%s0 + $0x8] sm:$0xf]
  %v426 = vld [vmem:[%s0 + $0xc] sm:$0xf]
  %427 = vst [vmem:[#allocation5] sm:$0xff] 0
  %428 = vst [vmem:[#allocation5 + $0x8] sm:$0xff] 0
  %429 = vst [vmem:[#allocation5 + $0x10] sm:$0xff] 0
  %430 = vst [vmem:[#allocation5 + $0x18] sm:$0x77] 0
  %vm431 = vcmask 519168
  %432 = vst.msk [vmem:[#allocation5] sm:$0xf] %vm431, %v423
  %vm433 = vcmask 519168
  %vm434 = vsmask.f32 3328
  %vm435 = vmand %vm433, %vm434
  %v436 = vld [vmem:[#allocation5 + $0x8] sm:$0xf]
  %v437 = vsel %vm435, %v424, %v436
  %438 = vst [vmem:[#allocation5 + $0x8] sm:$0xf] %v437
  %vm439 = vsmask.f32 7440
  %vm440 = vmor %vm434, %vm439
  %v442 = vshll.u32 %v425, 16
  %v444 = vrot.slane %v442, 5
  %v445 = vshrl.u32 %v425, 16
  %v447 = vrot.slane %v445, 4
  %v448 = vor.u32 %v447, %v444
  %v449 = vrot.slane %v448, 4
  %v451 = vshll.u32 %v426, 16
  %v453 = vrot.slane %v451, 5
  %v454 = vsel %vm440, %v449, %v453
  %v455 = vshrl.u32 %v426, 16
  %v457 = vrot.slane %v455, 4
  %v458 = vor.u32 %v457, %v453
  %v459 = vrot.slane %v458, 4
  %vm463 = vcmask 519171
  %vm464 = vsmask.f32 7950
  %vm465 = vmand %vm463, %vm464
  %v466 = vld [vmem:[#allocation5 + $0x8] sm:$0x8]
  %v467 = vsel %vm465, %v444, %v466
  %468 = vst [vmem:[#allocation5 + $0x8] sm:$0x8] %v467
  %469 = vst.msk [vmem:[#allocation5 + $0x10] sm:$0xf] %vm431, %v454
  %vm470 = vcmask 518144
  %471 = vst.msk [vmem:[#allocation5 + $0x18] sm:$0x7] %vm470, %v459
  %v473 = vshrl.u32 %v423, 16
  %v475 = vrot.slane %v473, 4
  %v476 = vshll.u32 %v423, 16
  %v478 = vrot.slane %v476, 5
  %v479 = vor.u32 %v475, %v478
  %v480 = vrot.slane %v479, 4
  %v482 = vshll.u32 %v424, 16
  %v484 = vrot.slane %v482, 5
  %v485 = vsel %vm440, %v480, %v484
  %v486 = vshrl.u32 %v424, 16
  %v488 = vrot.slane %v486, 4
  %v489 = vor.u32 %v488, %v484
  %v490 = vrot.slane %v489, 4
  %493 = vst.msk [vmem:[#allocation5 + $0x4] sm:$0xf] %vm431, %v485
  %v494 = vld [vmem:[#allocation5 + $0xc] sm:$0xf]
  %v495 = vsel %vm435, %v490, %v494
  %496 = vst [vmem:[#allocation5 + $0xc] sm:$0xf] %v495
  %vm499 = vcmask 1042432
  %vm500 = vcmask 1046532
  %vm501 = vmor %vm499, %vm500
  %v502 = vrot.slane %v425, 5
  %v503 = vrot.slane %v502, 4
  %v504 = vrot.slane %v426, 5
  %v505 = vsel %vm501, %v503, %v504
  %v506 = vrot.slane %v504, 4
  %v510 = vld [vmem:[#allocation5 + $0xc] sm:$0x8]
  %v511 = vsel %vm465, %v502, %v510
  %512 = vst [vmem:[#allocation5 + $0xc] sm:$0x8] %v511
  %513 = vst.msk [vmem:[#allocation5 + $0x14] sm:$0xf] %vm431, %v505
  %514 = vst.msk [vmem:[#allocation5 + $0x1c] sm:$0x7] %vm470, %v506
  %s515 = smul.u32 4, 32
  %s516 = smul.u32 %s515, 1
  %s517 = sshll.u32 %s516, 4
  %518 = dma.done [#allocation8], %s517
  %v519 = vld [vmem:[#allocation5] sm:$0xff]
  %v520 = vld [vmem:[#allocation5 + $0x8] sm:$0xff]
  %v521 = vld [vmem:[#allocation5 + $0x10] sm:$0xff]
  %v522 = vld [vmem:[#allocation5 + $0x18] sm:$0x77]
  %v523 = vld [vmem:[#allocation2] sm:$0xf]
  %v524 = vld [vmem:[#allocation2 + $0x4] sm:$0xf]
  %v525 = vld [vmem:[#allocation2 + $0x8] sm:$0xf]
  %v526 = vld [vmem:[#allocation2 + $0xc] sm:$0xf]
  %v527 = vld [vmem:[#allocation2 + $0x10] sm:$0xf]
  %v528 = vld [vmem:[#allocation2 + $0x14] sm:$0xf]
  %v529 = vld [vmem:[#allocation2 + $0x18] sm:$0xf]
  %v530 = vld [vmem:[#allocation2 + $0x1c] sm:$0xf]
  %v531 = vld [vmem:[#allocation2 + $0x20] sm:$0xf]
  %v532 = vld [vmem:[#allocation2 + $0x24] sm:$0xf]
  %v533 = vld [vmem:[#allocation2 + $0x28] sm:$0xf]
  %v534 = vld [vmem:[#allocation2 + $0x2c] sm:$0xf]
  %v535 = vld [vmem:[#allocation2 + $0x30] sm:$0xf]
  %v536 = vld [vmem:[#allocation2 + $0x34] sm:$0xf]
  %v537 = vld [vmem:[#allocation2 + $0x38] sm:$0xf]
  %v538 = vld [vmem:[#allocation2 + $0x3c] sm:$0xf]
  %v539 = vld [vmem:[#allocation2 + $0x40] sm:$0xf]
  %v540 = vld [vmem:[#allocation2 + $0x44] sm:$0xf]
  %v541 = vld [vmem:[#allocation2 + $0x48] sm:$0xf]
  %v542 = vld [vmem:[#allocation2 + $0x4c] sm:$0xf]
  %v543 = vld [vmem:[#allocation2 + $0x50] sm:$0xf]
  %v544 = vld [vmem:[#allocation2 + $0x54] sm:$0xf]
  %v545 = vld [vmem:[#allocation2 + $0x58] sm:$0xf]
  %v546 = vld [vmem:[#allocation2 + $0x5c] sm:$0xf]
  %v547 = vld [vmem:[#allocation2 + $0x60] sm:$0xf]
  %v548 = vld [vmem:[#allocation2 + $0x64] sm:$0xf]
  %v549 = vld [vmem:[#allocation2 + $0x68] sm:$0xf]
  %v550 = vld [vmem:[#allocation2 + $0x6c] sm:$0xf]
  %v551 = vld [vmem:[#allocation2 + $0x70] sm:$0xf]
  %v552 = vld [vmem:[#allocation2 + $0x74] sm:$0xf]
  %v553 = vld [vmem:[#allocation2 + $0x78] sm:$0xf]
  %v554 = vld [vmem:[#allocation2 + $0x7c] sm:$0xf]
  %v555 = vld [vmem:[%s1] sm:$0x1]
  %v557 = vperm.slane %v555, 0
  %v563 = vunpack.c.l.b16 %v519
  %v564 = vunpack.c.h.b16 %v519
  %v565 = vunpack.c.l.b16 %v520
  %v566 = vunpack.c.h.b16 %v520
  %v567 = vunpack.c.l.b16 %v521
  %v568 = vunpack.c.h.b16 %v521
  %v569 = vunpack.c.l.b16 %v522
  %v570 = vunpack.c.h.b16 %v522
  %v571 = vpack.c.b16 %v565, %v563
  %v572 = vpack.c.b16 %v566, %v564
  %v573 = vpack.c.b16 %v569, %v567
  %v574 = vpack.c.b16 %v570, %v568
  %v611 = vunpack.c.l.b16 %v523
  %v612 = vunpack.c.l.b16 %v524
  %v613 = vunpack.c.l.b16 %v525
  %v614 = vunpack.c.l.b16 %v526
  %v615 = vunpack.c.l.b16 %v527
  %v616 = vunpack.c.l.b16 %v528
  %v617 = vunpack.c.l.b16 %v529
  %v618 = vunpack.c.l.b16 %v530
  %v619 = vunpack.c.l.b16 %v531
  %v620 = vunpack.c.l.b16 %v532
  %v621 = vunpack.c.l.b16 %v533
  %v622 = vunpack.c.l.b16 %v534
  %v623 = vunpack.c.l.b16 %v535
  %v624 = vunpack.c.l.b16 %v536
  %v625 = vunpack.c.l.b16 %v537
  %v626 = vunpack.c.l.b16 %v538
  %v627 = vunpack.c.l.b16 %v539
  %v628 = vunpack.c.l.b16 %v540
  %v629 = vunpack.c.l.b16 %v541
  %v630 = vunpack.c.l.b16 %v542
  %v631 = vunpack.c.l.b16 %v543
  %v632 = vunpack.c.l.b16 %v544
  %v633 = vunpack.c.l.b16 %v545
  %v634 = vunpack.c.l.b16 %v546
  %v635 = vunpack.c.l.b16 %v547
  %v636 = vunpack.c.l.b16 %v548
  %v637 = vunpack.c.l.b16 %v549
  %v638 = vunpack.c.l.b16 %v550
  %v639 = vunpack.c.l.b16 %v551
  %v640 = vunpack.c.l.b16 %v552
  %v641 = vunpack.c.l.b16 %v553
  %v642 = vunpack.c.l.b16 %v554
  %v643 = vpack.c.b16 %v612, %v611
  %v644 = vpack.c.b16 %v614, %v613
  %v645 = vpack.c.b16 %v616, %v615
  %v646 = vpack.c.b16 %v618, %v617
  %v647 = vpack.c.b16 %v620, %v619
  %v648 = vpack.c.b16 %v622, %v621
  %v649 = vpack.c.b16 %v624, %v623
  %v650 = vpack.c.b16 %v626, %v625
  %v651 = vpack.c.b16 %v628, %v627
  %v652 = vpack.c.b16 %v630, %v629
  %v653 = vpack.c.b16 %v632, %v631
  %v654 = vpack.c.b16 %v634, %v633
  %v655 = vpack.c.b16 %v636, %v635
  %v656 = vpack.c.b16 %v638, %v637
  %v657 = vpack.c.b16 %v640, %v639
  %v658 = vpack.c.b16 %v642, %v641
  %675 = vmatpush.bf16.msra.mxu0 %v650
  %676 = vmatpush.bf16.msra.mxu0 %v649
  %677 = vmatpush.bf16.msra.mxu0 %v648
  %678 = vmatpush.bf16.msra.mxu0 %v647
  %679 = vmatpush.bf16.msra.mxu0 %v646
  %680 = vmatpush.bf16.msra.mxu0 %v645
  %681 = vmatpush.bf16.msra.mxu0 %v644
  %682 = vmatpush.bf16.msra.mxu0 %v643
  %683 = vmatmul.bf16.gmra.mxu0 %v571
  %v684 = vpop.f32.mrf.mxu0
  %v685 = vadd.f32 %v557, %v684
  %v686 = vpop.f32.mrf.mxu0
  %v687 = vadd.f32 %v557, %v686
  %688 = vmatmul.bf16.gmra.mxu0 %v573
  %v689 = vpop.f32.mrf.mxu0
  %v690 = vadd.f32 %v557, %v689
  %v691 = vpop.f32.mrf.mxu0
  %v692 = vadd.f32 %v557, %v691
  %693 = vdwg.mxu0
  %694 = vmatpush.bf16.msra.mxu0 %v658
  %695 = vmatpush.bf16.msra.mxu0 %v657
  %696 = vmatpush.bf16.msra.mxu0 %v656
  %697 = vmatpush.bf16.msra.mxu0 %v655
  %698 = vmatpush.bf16.msra.mxu0 %v654
  %699 = vmatpush.bf16.msra.mxu0 %v653
  %700 = vmatpush.bf16.msra.mxu0 %v652
  %701 = vmatpush.bf16.msra.mxu0 %v651
  %702 = vmatmul.bf16.gmra.mxu0 %v572
  %v703 = vpop.f32.mrf.mxu0
  %v704 = vadd.f32 %v685, %v703
  %v705 = vpop.f32.mrf.mxu0
  %v706 = vadd.f32 %v687, %v705
  %707 = vmatmul.bf16.gmra.mxu0 %v574
  %v708 = vpop.f32.mrf.mxu0
  %v709 = vadd.f32 %v690, %v708
  %v710 = vpop.f32.mrf.mxu0
  %v711 = vadd.f32 %v692, %v710
  %712 = vdwg.mxu0
  %v713 = vmax.f32 %v704, 0.0
  %v714 = vmax.f32 %v706, 0.0
  %v715 = vmax.f32 %v709, 0.0
  %v716 = vmax.f32 %v711, 0.0
  %v717 = vpack.c.bf16 %v713, %v713
  %v718 = vpack.c.bf16 %v714, %v714
  %v719 = vpack.c.bf16 %v715, %v715
  %v720 = vpack.c.bf16 %v716, %v716
  %721 = vst [vmem:[#allocation6] sm:$0xff] 0
  %722 = vst [vmem:[#allocation6 + $0x8] sm:$0xff] 0
  %723 = vst [vmem:[#allocation6 + $0x10] sm:$0xff] 0
  %724 = vst [vmem:[#allocation6 + $0x18] sm:$0x33] 0
  %vm725 = vcmask 977920
  %726 = vst.msk [vmem:[#allocation6] sm:$0xf] %vm725, %v717
  %vm727 = vcmask 976896
  %728 = vst.msk [vmem:[#allocation6 + $0x8] sm:$0x7] %vm727, %v718
  %v730 = vshrl.u32 %v718, 16
  %v732 = vrot.slane %v730, 4
  %v733 = vrot.slane %v732, 4
  %v735 = vshll.u32 %v719, 16
  %v737 = vrot.slane %v735, 5
  %v738 = vsel %vm440, %v733, %v737
  %v739 = vshrl.u32 %v719, 16
  %v741 = vrot.slane %v739, 4
  %v742 = vor.u32 %v741, %v737
  %v743 = vrot.slane %v742, 4
  %v745 = vshll.u32 %v720, 16
  %v747 = vrot.slane %v745, 5
  %v748 = vsel %vm440, %v743, %v747
  %v749 = vshrl.u32 %v720, 16
  %v751 = vrot.slane %v749, 4
  %v752 = vor.u32 %v751, %v747
  %v753 = vrot.slane %v752, 4
  %vm757 = vcmask 977923
  %758 = vst.msk [vmem:[#allocation6 + $0x8] sm:$0x8] %vm757, %v738
  %759 = vst.msk [vmem:[#allocation6 + $0x10] sm:$0xf] %vm725, %v748
  %vm760 = vcmask 975872
  %761 = vst.msk [vmem:[#allocation6 + $0x18] sm:$0x3] %vm760, %v753
  %v763 = vshrl.u32 %v717, 16
  %v765 = vrot.slane %v763, 4
  %v766 = vshll.u32 %v717, 16
  %v768 = vrot.slane %v766, 5
  %v769 = vor.u32 %v765, %v768
  %v770 = vrot.slane %v769, 4
  %v771 = vshll.u32 %v718, 16
  %v773 = vrot.slane %v771, 5
  %v774 = vsel %vm440, %v770, %v773
  %v775 = vor.u32 %v732, %v773
  %v776 = vrot.slane %v775, 4
  %779 = vst.msk [vmem:[#allocation6 + $0x4] sm:$0xf] %vm725, %v774
  %780 = vst.msk [vmem:[#allocation6 + $0xc] sm:$0x7] %vm727, %v776
  %v783 = vrot.slane %v719, 5
  %v784 = vrot.slane %v783, 4
  %v785 = vrot.slane %v720, 5
  %v786 = vsel %vm501, %v784, %v785
  %v787 = vrot.slane %v785, 4
  %791 = vst.msk [vmem:[#allocation6 + $0xc] sm:$0x8] %vm757, %v783
  %792 = vst.msk [vmem:[#allocation6 + $0x14] sm:$0xf] %vm725, %v786
  %793 = vst.msk [vmem:[#allocation6 + $0x1c] sm:$0x3] %vm760, %v787
  %s794 = smul.u32 %s515, 2
  %s795 = sshll.u32 %s794, 4
  %796 = dma.done %s69, %s795
  %v797 = vld [vmem:[#allocation6] sm:$0xff]
  %v798 = vld [vmem:[#allocation6 + $0x8] sm:$0xff]
  %v799 = vld [vmem:[#allocation6 + $0x10] sm:$0xff]
  %v800 = vld [vmem:[#allocation6 + $0x18] sm:$0x33]
  %v801 = vld [vmem:[#allocation3] sm:$0xff]
  %v802 = vld [vmem:[#allocation3 + $0x8] sm:$0xff]
  %v803 = vld [vmem:[#allocation3 + $0x10] sm:$0xff]
  %v804 = vld [vmem:[#allocation3 + $0x18] sm:$0xff]
  %v805 = vld [vmem:[#allocation3 + $0x20] sm:$0xff]
  %v806 = vld [vmem:[#allocation3 + $0x28] sm:$0xff]
  %v807 = vld [vmem:[#allocation3 + $0x30] sm:$0xff]
  %v808 = vld [vmem:[#allocation3 + $0x38] sm:$0xff]
  %v809 = vld [vmem:[#allocation3 + $0x40] sm:$0xff]
  %v810 = vld [vmem:[#allocation3 + $0x48] sm:$0xff]
  %v811 = vld [vmem:[#allocation3 + $0x50] sm:$0xff]
  %v812 = vld [vmem:[#allocation3 + $0x58] sm:$0xff]
  %v813 = vld [vmem:[#allocation3 + $0x60] sm:$0xff]
  %v814 = vld [vmem:[#allocation3 + $0x68] sm:$0xff]
  %v815 = vld [vmem:[#allocation3 + $0x70] sm:$0xff]
  %v816 = vld [vmem:[#allocation3 + $0x78] sm:$0xff]
  %v817 = vld [vmem:[#allocation3 + $0x80] sm:$0xff]
  %v818 = vld [vmem:[#allocation3 + $0x88] sm:$0xff]
  %v819 = vld [vmem:[#allocation3 + $0x90] sm:$0xff]
  %v820 = vld [vmem:[#allocation3 + $0x98] sm:$0xff]
  %v821 = vld [vmem:[#allocation3 + $0xa0] sm:$0xff]
  %v822 = vld [vmem:[#allocation3 + $0xa8] sm:$0xff]
  %v823 = vld [vmem:[#allocation3 + $0xb0] sm:$0xff]
  %v824 = vld [vmem:[#allocation3 + $0xb8] sm:$0xff]
  %v825 = vld [vmem:[#allocation3 + $0xc0] sm:$0xff]
  %v826 = vld [vmem:[#allocation3 + $0xc8] sm:$0xff]
  %v827 = vld [vmem:[#allocation3 + $0xd0] sm:$0xff]
  %v828 = vld [vmem:[#allocation3 + $0xd8] sm:$0xff]
  %v829 = vld [vmem:[#allocation3 + $0xe0] sm:$0xff]
  %v830 = vld [vmem:[#allocation3 + $0xe8] sm:$0xff]
  %v831 = vld [vmem:[#allocation3 + $0xf0] sm:$0xff]
  %v832 = vld [vmem:[#allocation3 + $0xf8] sm:$0xff]
  %v833 = vld [vmem:[%s2] sm:$0x3]
  %v835 = vperm.slane %v833, 0
  %v836 = vperm.slane %v833, 1
  %v843 = vunpack.c.l.b16 %v797
  %v844 = vunpack.c.h.b16 %v797
  %v845 = vunpack.c.l.b16 %v798
  %v846 = vunpack.c.h.b16 %v798
  %v847 = vunpack.c.l.b16 %v799
  %v848 = vunpack.c.h.b16 %v799
  %v849 = vunpack.c.l.b16 %v800
  %v850 = vunpack.c.h.b16 %v800
  %v851 = vpack.c.b16 %v845, %v843
  %v852 = vpack.c.b16 %v846, %v844
  %v853 = vpack.c.b16 %v849, %v847
  %v854 = vpack.c.b16 %v850, %v848
  %v891 = vunpack.c.l.b16 %v801
  %v892 = vunpack.c.h.b16 %v801
  %v893 = vunpack.c.l.b16 %v802
  %v894 = vunpack.c.h.b16 %v802
  %v895 = vunpack.c.l.b16 %v803
  %v896 = vunpack.c.h.b16 %v803
  %v897 = vunpack.c.l.b16 %v804
  %v898 = vunpack.c.h.b16 %v804
  %v899 = vunpack.c.l.b16 %v805
  %v900 = vunpack.c.h.b16 %v805
  %v901 = vunpack.c.l.b16 %v806
  %v902 = vunpack.c.h.b16 %v806
  %v903 = vunpack.c.l.b16 %v807
  %v904 = vunpack.c.h.b16 %v807
  %v905 = vunpack.c.l.b16 %v808
  %v906 = vunpack.c.h.b16 %v808
  %v907 = vunpack.c.l.b16 %v809
  %v908 = vunpack.c.h.b16 %v809
  %v909 = vunpack.c.l.b16 %v810
  %v910 = vunpack.c.h.b16 %v810
  %v911 = vunpack.c.l.b16 %v811
  %v912 = vunpack.c.h.b16 %v811
  %v913 = vunpack.c.l.b16 %v812
  %v914 = vunpack.c.h.b16 %v812
  %v915 = vunpack.c.l.b16 %v813
  %v916 = vunpack.c.h.b16 %v813
  %v917 = vunpack.c.l.b16 %v814
  %v918 = vunpack.c.h.b16 %v814
  %v919 = vunpack.c.l.b16 %v815
  %v920 = vunpack.c.h.b16 %v815
  %v921 = vunpack.c.l.b16 %v816
  %v922 = vunpack.c.h.b16 %v816
  %v923 = vunpack.c.l.b16 %v817
  %v924 = vunpack.c.h.b16 %v817
  %v925 = vunpack.c.l.b16 %v818
  %v926 = vunpack.c.h.b16 %v818
  %v927 = vunpack.c.l.b16 %v819
  %v928 = vunpack.c.h.b16 %v819
  %v929 = vunpack.c.l.b16 %v820
  %v930 = vunpack.c.h.b16 %v820
  %v931 = vunpack.c.l.b16 %v821
  %v932 = vunpack.c.h.b16 %v821
  %v933 = vunpack.c.l.b16 %v822
  %v934 = vunpack.c.h.b16 %v822
  %v935 = vunpack.c.l.b16 %v823
  %v936 = vunpack.c.h.b16 %v823
  %v937 = vunpack.c.l.b16 %v824
  %v938 = vunpack.c.h.b16 %v824
  %v939 = vunpack.c.l.b16 %v825
  %v940 = vunpack.c.h.b16 %v825
  %v941 = vunpack.c.l.b16 %v826
  %v942 = vunpack.c.h.b16 %v826
  %v943 = vunpack.c.l.b16 %v827
  %v944 = vunpack.c.h.b16 %v827
  %v945 = vunpack.c.l.b16 %v828
  %v946 = vunpack.c.h.b16 %v828
  %v947 = vunpack.c.l.b16 %v829
  %v948 = vunpack.c.h.b16 %v829
  %v949 = vunpack.c.l.b16 %v830
  %v950 = vunpack.c.h.b16 %v830
  %v951 = vunpack.c.l.b16 %v831
  %v952 = vunpack.c.h.b16 %v831
  %v953 = vunpack.c.l.b16 %v832
  %v954 = vunpack.c.h.b16 %v832
  %v955 = vpack.c.b16 %v893, %v891
  %v956 = vpack.c.b16 %v894, %v892
  %v957 = vpack.c.b16 %v897, %v895
  %v958 = vpack.c.b16 %v898, %v896
  %v959 = vpack.c.b16 %v901, %v899
  %v960 = vpack.c.b16 %v902, %v900
  %v961 = vpack.c.b16 %v905, %v903
  %v962 = vpack.c.b16 %v906, %v904
  %v963 = vpack.c.b16 %v909, %v907
  %v964 = vpack.c.b16 %v910, %v908
  %v965 = vpack.c.b16 %v913, %v911
  %v966 = vpack.c.b16 %v914, %v912
  %v967 = vpack.c.b16 %v917, %v915
  %v968 = vpack.c.b16 %v918, %v916
  %v969 = vpack.c.b16 %v921, %v919
  %v970 = vpack.c.b16 %v922, %v920
  %v971 = vpack.c.b16 %v925, %v923
  %v972 = vpack.c.b16 %v926, %v924
  %v973 = vpack.c.b16 %v929, %v927
  %v974 = vpack.c.b16 %v930, %v928
  %v975 = vpack.c.b16 %v933, %v931
  %v976 = vpack.c.b16 %v934, %v932
  %v977 = vpack.c.b16 %v937, %v935
  %v978 = vpack.c.b16 %v938, %v936
  %v979 = vpack.c.b16 %v941, %v939
  %v980 = vpack.c.b16 %v942, %v940
  %v981 = vpack.c.b16 %v945, %v943
  %v982 = vpack.c.b16 %v946, %v944
  %v983 = vpack.c.b16 %v949, %v947
  %v984 = vpack.c.b16 %v950, %v948
  %v985 = vpack.c.b16 %v953, %v951
  %v986 = vpack.c.b16 %v954, %v952
  %1019 = vmatpush.bf16.msra.mxu0 %v969
  %1020 = vmatpush.bf16.msra.mxu0 %v967
  %1021 = vmatpush.bf16.msra.mxu0 %v965
  %1022 = vmatpush.bf16.msra.mxu0 %v963
  %1023 = vmatpush.bf16.msra.mxu0 %v961
  %1024 = vmatpush.bf16.msra.mxu0 %v959
  %1025 = vmatpush.bf16.msra.mxu0 %v957
  %1026 = vmatpush.bf16.msra.mxu0 %v955
  %1027 = vmatmul.bf16.gmra.mxu0 %v851
  %v1028 = vpop.f32.mrf.mxu0
  %v1029 = vadd.f32 %v835, %v1028
  %v1030 = vpop.f32.mrf.mxu0
  %v1031 = vadd.f32 %v835, %v1030
  %1032 = vmatmul.bf16.gmra.mxu0 %v853
  %v1033 = vpop.f32.mrf.mxu0
  %v1034 = vadd.f32 %v835, %v1033
  %v1035 = vpop.f32.mrf.mxu0
  %v1036 = vadd.f32 %v835, %v1035
  %1037 = vdwg.mxu0
  %1038 = vmatpush.bf16.msra.mxu0 %v985
  %1039 = vmatpush.bf16.msra.mxu0 %v983
  %1040 = vmatpush.bf16.msra.mxu0 %v981
  %1041 = vmatpush.bf16.msra.mxu0 %v979
  %1042 = vmatpush.bf16.msra.mxu0 %v977
  %1043 = vmatpush.bf16.msra.mxu0 %v975
  %1044 = vmatpush.bf16.msra.mxu0 %v973
  %1045 = vmatpush.bf16.msra.mxu0 %v971
  %1046 = vmatmul.bf16.gmra.mxu0 %v852
  %v1047 = vpop.f32.mrf.mxu0
  %v1048 = vadd.f32 %v1029, %v1047
  %v1049 = vpop.f32.mrf.mxu0
  %v1050 = vadd.f32 %v1031, %v1049
  %1051 = vmatmul.bf16.gmra.mxu0 %v854
  %v1052 = vpop.f32.mrf.mxu0
  %v1053 = vadd.f32 %v1034, %v1052
  %v1054 = vpop.f32.mrf.mxu0
  %v1055 = vadd.f32 %v1036, %v1054
  %1056 = vdwg.mxu0
  %1057 = vmatpush.bf16.msra.mxu0 %v970
  %1058 = vmatpush.bf16.msra.mxu0 %v968
  %1059 = vmatpush.bf16.msra.mxu0 %v966
  %1060 = vmatpush.bf16.msra.mxu0 %v964
  %1061 = vmatpush.bf16.msra.mxu0 %v962
  %1062 = vmatpush.bf16.msra.mxu0 %v960
  %1063 = vmatpush.bf16.msra.mxu0 %v958
  %1064 = vmatpush.bf16.msra.mxu0 %v956
  %1065 = vmatmul.bf16.gmra.mxu0 %v851
  %v1066 = vpop.f32.mrf.mxu0
  %v1067 = vadd.f32 %v836, %v1066
  %v1068 = vpop.f32.mrf.mxu0
  %v1069 = vadd.f32 %v836, %v1068
  %1070 = vmatmul.bf16.gmra.mxu0 %v853
  %v1071 = vpop.f32.mrf.mxu0
  %v1072 = vadd.f32 %v836, %v1071
  %v1073 = vpop.f32.mrf.mxu0
  %v1074 = vadd.f32 %v836, %v1073
  %1075 = vdwg.mxu0
  %1076 = vmatpush.bf16.msra.mxu0 %v986
  %1077 = vmatpush.bf16.msra.mxu0 %v984
  %1078 = vmatpush.bf16.msra.mxu0 %v982
  %1079 = vmatpush.bf16.msra.mxu0 %v980
  %1080 = vmatpush.bf16.msra.mxu0 %v978
  %1081 = vmatpush.bf16.msra.mxu0 %v976
  %1082 = vmatpush.bf16.msra.mxu0 %v974
  %1083 = vmatpush.bf16.msra.mxu0 %v972
  %1084 = vmatmul.bf16.gmra.mxu0 %v852
  %v1085 = vpop.f32.mrf.mxu0
  %v1086 = vadd.f32 %v1067, %v1085
  %v1087 = vpop.f32.mrf.mxu0
  %v1088 = vadd.f32 %v1069, %v1087
  %1089 = vmatmul.bf16.gmra.mxu0 %v854
  %v1090 = vpop.f32.mrf.mxu0
  %v1091 = vadd.f32 %v1072, %v1090
  %v1092 = vpop.f32.mrf.mxu0
  %v1093 = vadd.f32 %v1074, %v1092
  %1094 = vdwg.mxu0
  %v1095 = vmax.f32 %v1048, 0.0
  %v1096 = vmax.f32 %v1086, 0.0
  %v1097 = vmax.f32 %v1050, 0.0
  %v1098 = vmax.f32 %v1088, 0.0
  %v1099 = vmax.f32 %v1053, 0.0
  %v1100 = vmax.f32 %v1091, 0.0
  %v1101 = vmax.f32 %v1055, 0.0
  %v1102 = vmax.f32 %v1093, 0.0
  %v1103 = vpack.c.bf16 %v1096, %v1095
  %v1104 = vpack.c.bf16 %v1098, %v1097
  %v1105 = vpack.c.bf16 %v1100, %v1099
  %v1106 = vpack.c.bf16 %v1102, %v1101
  %1107 = vst [vmem:[#allocation7] sm:$0xff] 0
  %1108 = vst [vmem:[#allocation7 + $0x8] sm:$0xff] 0
  %1109 = vst [vmem:[#allocation7 + $0x10] sm:$0xff] 0
  %1110 = vst [vmem:[#allocation7 + $0x18] sm:$0xff] 0
  %1111 = vst [vmem:[#allocation7 + $0x20] sm:$0xff] 0
  %1112 = vst [vmem:[#allocation7 + $0x28] sm:$0xff] 0
  %1113 = vst [vmem:[#allocation7 + $0x30] sm:$0x11] 0
  %1114 = vst [vmem:[#allocation7 + $0x38] sm:$0x11] 0
  %vm1115 = vcmask 1043456
  %vm1116 = vcmask 785412
  %vm1117 = vmor %vm1116, %vm1115
  %1118 = vst.msk [vmem:[#allocation7] sm:$0xff] %vm1117, %v1103
  %vm1119 = vsmask.f32 2304
  %vm1120 = vmand %vm499, %vm1119
  %vm1121 = vcmask 784388
  %vm1122 = vsmask.f32 6400
  %vm1123 = vmand %vm1121, %vm1122
  %vm1124 = vmor %vm1123, %vm1120
  %v1125 = vld [vmem:[#allocation7 + $0x10] sm:$0x77]
  %v1126 = vsel %vm1124, %v1104, %v1125
  %1127 = vst [vmem:[#allocation7 + $0x10] sm:$0x77] %v1126
  %v1129 = vshrl.u32 %v1104, 16
  %v1131 = vrot.slane %v1129, 4
  %v1132 = vshll.u32 %v1104, 16
  %v1134 = vrot.slane %v1132, 5
  %v1135 = vor.u32 %v1131, %v1134
  %v1136 = vrot.slane %v1135, 4
  %v1138 = vshll.u32 %v1105, 16
  %v1140 = vrot.slane %v1138, 5
  %v1141 = vsel %vm440, %v1136, %v1140
  %v1142 = vshrl.u32 %v1105, 16
  %v1144 = vrot.slane %v1142, 4
  %v1145 = vor.u32 %v1144, %v1140
  %v1146 = vrot.slane %v1145, 4
  %v1148 = vshll.u32 %v1106, 16
  %v1150 = vrot.slane %v1148, 5
  %v1151 = vsel %vm440, %v1146, %v1150
  %v1152 = vshrl.u32 %v1106, 16
  %v1154 = vrot.slane %v1152, 4
  %v1155 = vor.u32 %v1154, %v1150
  %v1156 = vrot.slane %v1155, 4
  %vm1160 = vcmask 1043458
  %vm1161 = vsmask.f32 7946
  %vm1162 = vmand %vm1160, %vm1161
  %vm1163 = vcmask 785414
  %vm1164 = vsmask.f32 7962
  %vm1165 = vmand %vm1163, %vm1164
  %vm1166 = vmor %vm1165, %vm1162
  %v1167 = vld [vmem:[#allocation7 + $0x10] sm:$0xcc]
  %v1168 = vsel %vm1166, %v1141, %v1167
  %1169 = vst [vmem:[#allocation7 + $0x10] sm:$0xcc] %v1168
  %1170 = vst.msk [vmem:[#allocation7 + $0x20] sm:$0xff] %vm1117, %v1151
  %vm1171 = vcmask 1040384
  %vm1172 = vcmask 782340
  %vm1173 = vmor %vm1172, %vm1171
  %1174 = vst.msk [vmem:[#allocation7 + $0x30] sm:$0x11] %vm1173, %v1156
  %v1176 = vshrl.u32 %v1103, 16
  %v1178 = vrot.slane %v1176, 4
  %v1179 = vshll.u32 %v1103, 16
  %v1181 = vrot.slane %v1179, 5
  %v1182 = vor.u32 %v1178, %v1181
  %v1183 = vrot.slane %v1182, 4
  %v1184 = vsel %vm440, %v1183, %v1134
  %1187 = vst.msk [vmem:[#allocation7 + $0x8] sm:$0xff] %vm1117, %v1184
  %v1188 = vld [vmem:[#allocation7 + $0x18] sm:$0x77]
  %v1189 = vsel %vm1124, %v1136, %v1188
  %1190 = vst [vmem:[#allocation7 + $0x18] sm:$0x77] %v1189
  %v1194 = vrot.slane %v1104, 5
  %v1195 = vrot.slane %v1194, 4
  %v1196 = vrot.slane %v1105, 5
  %v1197 = vsel %vm501, %v1195, %v1196
  %v1198 = vrot.slane %v1196, 4
  %v1199 = vrot.slane %v1106, 5
  %v1200 = vsel %vm501, %v1198, %v1199
  %v1201 = vrot.slane %v1199, 4
  %v1205 = vld [vmem:[#allocation7 + $0x18] sm:$0xcc]
  %v1206 = vsel %vm1166, %v1197, %v1205
  %1207 = vst [vmem:[#allocation7 + $0x18] sm:$0xcc] %v1206
  %1208 = vst.msk [vmem:[#allocation7 + $0x28] sm:$0xff] %vm1117, %v1200
  %1209 = vst.msk [vmem:[#allocation7 + $0x38] sm:$0x11] %vm1173, %v1201
  %s1210 = smul.u32 4, 64
  %s1211 = smul.u32 %s1210, 4
  %s1212 = sshll.u32 %s1211, 4
  %1213 = dma.done %s150, %s1212
  %v1214 = vld [vmem:[#allocation7] sm:$0xff]
  %v1215 = vld [vmem:[#allocation7 + $0x8] sm:$0xff]
  %v1216 = vld [vmem:[#allocation7 + $0x10] sm:$0xff]
  %v1217 = vld [vmem:[#allocation7 + $0x18] sm:$0xff]
  %v1218 = vld [vmem:[#allocation7 + $0x20] sm:$0xff]
  %v1219 = vld [vmem:[#allocation7 + $0x28] sm:$0xff]
  %v1220 = vld [vmem:[#allocation7 + $0x30] sm:$0x11]
  %v1221 = vld [vmem:[#allocation7 + $0x38] sm:$0x11]
  %v1222 = vld [vmem:[#allocation4] sm:$0xff]
  %v1223 = vld [vmem:[#allocation4 + $0x8] sm:$0xff]
  %v1224 = vld [vmem:[#allocation4 + $0x10] sm:$0xff]
  %v1225 = vld [vmem:[#allocation4 + $0x18] sm:$0xff]
  %v1226 = vld [vmem:[#allocation4 + $0x20] sm:$0xff]
  %v1227 = vld [vmem:[#allocation4 + $0x28] sm:$0xff]
  %v1228 = vld [vmem:[#allocation4 + $0x30] sm:$0xff]
  %v1229 = vld [vmem:[#allocation4 + $0x38] sm:$0xff]
  %v1230 = vld [vmem:[#allocation4 + $0x40] sm:$0xff]
  %v1231 = vld [vmem:[#allocation4 + $0x48] sm:$0xff]
  %v1232 = vld [vmem:[#allocation4 + $0x50] sm:$0xff]
  %v1233 = vld [vmem:[#allocation4 + $0x58] sm:$0xff]
  %v1234 = vld [vmem:[#allocation4 + $0x60] sm:$0xff]
  %v1235 = vld [vmem:[#allocation4 + $0x68] sm:$0xff]
  %v1236 = vld [vmem:[#allocation4 + $0x70] sm:$0xff]
  %v1237 = vld [vmem:[#allocation4 + $0x78] sm:$0xff]
  %v1238 = vld [vmem:[#allocation4 + $0x80] sm:$0xff]
  %v1239 = vld [vmem:[#allocation4 + $0x88] sm:$0xff]
  %v1240 = vld [vmem:[#allocation4 + $0x90] sm:$0xff]
  %v1241 = vld [vmem:[#allocation4 + $0x98] sm:$0xff]
  %v1242 = vld [vmem:[#allocation4 + $0xa0] sm:$0xff]
  %v1243 = vld [vmem:[#allocation4 + $0xa8] sm:$0xff]
  %v1244 = vld [vmem:[#allocation4 + $0xb0] sm:$0xff]
  %v1245 = vld [vmem:[#allocation4 + $0xb8] sm:$0xff]
  %v1246 = vld [vmem:[#allocation4 + $0xc0] sm:$0xff]
  %v1247 = vld [vmem:[#allocation4 + $0xc8] sm:$0xff]
  %v1248 = vld [vmem:[#allocation4 + $0xd0] sm:$0xff]
  %v1249 = vld [vmem:[#allocation4 + $0xd8] sm:$0xff]
  %v1250 = vld [vmem:[#allocation4 + $0xe0] sm:$0xff]
  %v1251 = vld [vmem:[#allocation4 + $0xe8] sm:$0xff]
  %v1252 = vld [vmem:[#allocation4 + $0xf0] sm:$0xff]
  %v1253 = vld [vmem:[#allocation4 + $0xf8] sm:$0xff]
  %v1254 = vld [vmem:[#allocation4 + $0x100] sm:$0xff]
  %v1255 = vld [vmem:[#allocation4 + $0x108] sm:$0xff]
  %v1256 = vld [vmem:[#allocation4 + $0x110] sm:$0xff]
  %v1257 = vld [vmem:[#allocation4 + $0x118] sm:$0xff]
  %v1258 = vld [vmem:[#allocation4 + $0x120] sm:$0xff]
  %v1259 = vld [vmem:[#allocation4 + $0x128] sm:$0xff]
  %v1260 = vld [vmem:[#allocation4 + $0x130] sm:$0xff]
  %v1261 = vld [vmem:[#allocation4 + $0x138] sm:$0xff]
  %v1262 = vld [vmem:[#allocation4 + $0x140] sm:$0xff]
  %v1263 = vld [vmem:[#allocation4 + $0x148] sm:$0xff]
  %v1264 = vld [vmem:[#allocation4 + $0x150] sm:$0xff]
  %v1265 = vld [vmem:[#allocation4 + $0x158] sm:$0xff]
  %v1266 = vld [vmem:[#allocation4 + $0x160] sm:$0xff]
  %v1267 = vld [vmem:[#allocation4 + $0x168] sm:$0xff]
  %v1268 = vld [vmem:[#allocation4 + $0x170] sm:$0xff]
  %v1269 = vld [vmem:[#allocation4 + $0x178] sm:$0xff]
  %v1270 = vld [vmem:[#allocation4 + $0x180] sm:$0xff]
  %v1271 = vld [vmem:[#allocation4 + $0x188] sm:$0xff]
  %v1272 = vld [vmem:[#allocation4 + $0x190] sm:$0xff]
  %v1273 = vld [vmem:[#allocation4 + $0x198] sm:$0xff]
  %v1274 = vld [vmem:[#allocation4 + $0x1a0] sm:$0xff]
  %v1275 = vld [vmem:[#allocation4 + $0x1a8] sm:$0xff]
  %v1276 = vld [vmem:[#allocation4 + $0x1b0] sm:$0xff]
  %v1277 = vld [vmem:[#allocation4 + $0x1b8] sm:$0xff]
  %v1278 = vld [vmem:[#allocation4 + $0x1c0] sm:$0xff]
  %v1279 = vld [vmem:[#allocation4 + $0x1c8] sm:$0xff]
  %v1280 = vld [vmem:[#allocation4 + $0x1d0] sm:$0xff]
  %v1281 = vld [vmem:[#allocation4 + $0x1d8] sm:$0xff]
  %v1282 = vld [vmem:[#allocation4 + $0x1e0] sm:$0xff]
  %v1283 = vld [vmem:[#allocation4 + $0x1e8] sm:$0xff]
  %v1284 = vld [vmem:[#allocation4 + $0x1f0] sm:$0xff]
  %v1285 = vld [vmem:[#allocation4 + $0x1f8] sm:$0xff]
  %v1286 = vld [vmem:[#allocation4 + $0x200] sm:$0xff]
  %v1287 = vld [vmem:[#allocation4 + $0x208] sm:$0xff]
  %v1288 = vld [vmem:[#allocation4 + $0x210] sm:$0xff]
  %v1289 = vld [vmem:[#allocation4 + $0x218] sm:$0xff]
  %v1290 = vld [vmem:[#allocation4 + $0x220] sm:$0xff]
  %v1291 = vld [vmem:[#allocation4 + $0x228] sm:$0xff]
  %v1292 = vld [vmem:[#allocation4 + $0x230] sm:$0xff]
  %v1293 = vld [vmem:[#allocation4 + $0x238] sm:$0xff]
  %v1294 = vld [vmem:[#allocation4 + $0x240] sm:$0xff]
  %v1295 = vld [vmem:[#allocation4 + $0x248] sm:$0xff]
  %v1296 = vld [vmem:[#allocation4 + $0x250] sm:$0xff]
  %v1297 = vld [vmem:[#allocation4 + $0x258] sm:$0xff]
  %v1298 = vld [vmem:[#allocation4 + $0x260] sm:$0xff]
  %v1299 = vld [vmem:[#allocation4 + $0x268] sm:$0xff]
  %v1300 = vld [vmem:[#allocation4 + $0x270] sm:$0xff]
  %v1301 = vld [vmem:[#allocation4 + $0x278] sm:$0xff]
  %v1302 = vld [vmem:[#allocation4 + $0x280] sm:$0xff]
  %v1303 = vld [vmem:[#allocation4 + $0x288] sm:$0xff]
  %v1304 = vld [vmem:[#allocation4 + $0x290] sm:$0xff]
  %v1305 = vld [vmem:[#allocation4 + $0x298] sm:$0xff]
  %v1306 = vld [vmem:[#allocation4 + $0x2a0] sm:$0xff]
  %v1307 = vld [vmem:[#allocation4 + $0x2a8] sm:$0xff]
  %v1308 = vld [vmem:[#allocation4 + $0x2b0] sm:$0xff]
  %v1309 = vld [vmem:[#allocation4 + $0x2b8] sm:$0xff]
  %v1310 = vld [vmem:[#allocation4 + $0x2c0] sm:$0xff]
  %v1311 = vld [vmem:[#allocation4 + $0x2c8] sm:$0xff]
  %v1312 = vld [vmem:[#allocation4 + $0x2d0] sm:$0xff]
  %v1313 = vld [vmem:[#allocation4 + $0x2d8] sm:$0xff]
  %v1314 = vld [vmem:[#allocation4 + $0x2e0] sm:$0xff]
  %v1315 = vld [vmem:[#allocation4 + $0x2e8] sm:$0xff]
  %v1316 = vld [vmem:[#allocation4 + $0x2f0] sm:$0xff]
  %v1317 = vld [vmem:[#allocation4 + $0x2f8] sm:$0xff]
  %v1318 = vld [vmem:[#allocation4 + $0x300] sm:$0xff]
  %v1319 = vld [vmem:[#allocation4 + $0x308] sm:$0xff]
  %v1320 = vld [vmem:[#allocation4 + $0x310] sm:$0xff]
  %v1321 = vld [vmem:[#allocation4 + $0x318] sm:$0xff]
  %v1322 = vld [vmem:[#allocation4 + $0x320] sm:$0xff]
  %v1323 = vld [vmem:[#allocation4 + $0x328] sm:$0xff]
  %v1324 = vld [vmem:[#allocation4 + $0x330] sm:$0xff]
  %v1325 = vld [vmem:[#allocation4 + $0x338] sm:$0xff]
  %v1326 = vld [vmem:[#allocation4 + $0x340] sm:$0xff]
  %v1327 = vld [vmem:[#allocation4 + $0x348] sm:$0xff]
  %v1328 = vld [vmem:[#allocation4 + $0x350] sm:$0xff]
  %v1329 = vld [vmem:[#allocation4 + $0x358] sm:$0xff]
  %v1330 = vld [vmem:[#allocation4 + $0x360] sm:$0xff]
  %v1331 = vld [vmem:[#allocation4 + $0x368] sm:$0xff]
  %v1332 = vld [vmem:[#allocation4 + $0x370] sm:$0xff]
  %v1333 = vld [vmem:[#allocation4 + $0x378] sm:$0xff]
  %v1334 = vld [vmem:[#allocation4 + $0x380] sm:$0xff]
  %v1335 = vld [vmem:[#allocation4 + $0x388] sm:$0xff]
  %v1336 = vld [vmem:[#allocation4 + $0x390] sm:$0xff]
  %v1337 = vld [vmem:[#allocation4 + $0x398] sm:$0xff]
  %v1338 = vld [vmem:[#allocation4 + $0x3a0] sm:$0xff]
  %v1339 = vld [vmem:[#allocation4 + $0x3a8] sm:$0xff]
  %v1340 = vld [vmem:[#allocation4 + $0x3b0] sm:$0xff]
  %v1341 = vld [vmem:[#allocation4 + $0x3b8] sm:$0xff]
  %v1342 = vld [vmem:[#allocation4 + $0x3c0] sm:$0xff]
  %v1343 = vld [vmem:[#allocation4 + $0x3c8] sm:$0xff]
  %v1344 = vld [vmem:[#allocation4 + $0x3d0] sm:$0xff]
  %v1345 = vld [vmem:[#allocation4 + $0x3d8] sm:$0xff]
  %v1346 = vld [vmem:[#allocation4 + $0x3e0] sm:$0xff]
  %v1347 = vld [vmem:[#allocation4 + $0x3e8] sm:$0xff]
  %v1348 = vld [vmem:[#allocation4 + $0x3f0] sm:$0xff]
  %v1349 = vld [vmem:[#allocation4 + $0x3f8] sm:$0xff]
  %v1350 = vld [vmem:[%s3] sm:$0xf]
  %v1352 = vperm.slane %v1350, 0
  %v1353 = vperm.slane %v1350, 1
  %v1354 = vperm.slane %v1350, 2
  %v1355 = vperm.slane %v1350, 3
  %v1368 = vunpack.c.l.b16 %v1214
  %v1369 = vunpack.c.h.b16 %v1214
  %v1370 = vunpack.c.l.b16 %v1215
  %v1371 = vunpack.c.h.b16 %v1215
  %v1372 = vunpack.c.l.b16 %v1216
  %v1373 = vunpack.c.h.b16 %v1216
  %v1374 = vunpack.c.l.b16 %v1217
  %v1375 = vunpack.c.h.b16 %v1217
  %v1376 = vunpack.c.l.b16 %v1218
  %v1377 = vunpack.c.h.b16 %v1218
  %v1378 = vunpack.c.l.b16 %v1219
  %v1379 = vunpack.c.h.b16 %v1219
  %v1380 = vunpack.c.l.b16 %v1220
  %v1381 = vunpack.c.h.b16 %v1220
  %v1382 = vunpack.c.l.b16 %v1221
  %v1383 = vunpack.c.h.b16 %v1221
  %v1384 = vpack.c.b16 %v1372, %v1368
  %v1385 = vpack.c.b16 %v1373, %v1369
  %v1386 = vpack.c.b16 %v1374, %v1370
  %v1387 = vpack.c.b16 %v1375, %v1371
  %v1388 = vpack.c.b16 %v1380, %v1376
  %v1389 = vpack.c.b16 %v1381, %v1377
  %v1390 = vpack.c.b16 %v1382, %v1378
  %v1391 = vpack.c.b16 %v1383, %v1379
  %v1528 = vunpack.c.l.b16 %v1222
  %v1529 = vunpack.c.h.b16 %v1222
  %v1530 = vunpack.c.l.b16 %v1223
  %v1531 = vunpack.c.h.b16 %v1223
  %v1532 = vunpack.c.l.b16 %v1224
  %v1533 = vunpack.c.h.b16 %v1224
  %v1534 = vunpack.c.l.b16 %v1225
  %v1535 = vunpack.c.h.b16 %v1225
  %v1536 = vunpack.c.l.b16 %v1226
  %v1537 = vunpack.c.h.b16 %v1226
  %v1538 = vunpack.c.l.b16 %v1227
  %v1539 = vunpack.c.h.b16 %v1227
  %v1540 = vunpack.c.l.b16 %v1228
  %v1541 = vunpack.c.h.b16 %v1228
  %v1542 = vunpack.c.l.b16 %v1229
  %v1543 = vunpack.c.h.b16 %v1229
  %v1544 = vunpack.c.l.b16 %v1230
  %v1545 = vunpack.c.h.b16 %v1230
  %v1546 = vunpack.c.l.b16 %v1231
  %v1547 = vunpack.c.h.b16 %v1231
  %v1548 = vunpack.c.l.b16 %v1232
  %v1549 = vunpack.c.h.b16 %v1232
  %v1550 = vunpack.c.l.b16 %v1233
  %v1551 = vunpack.c.h.b16 %v1233
  %v1552 = vunpack.c.l.b16 %v1234
  %v1553 = vunpack.c.h.b16 %v1234
  %v1554 = vunpack.c.l.b16 %v1235
  %v1555 = vunpack.c.h.b16 %v1235
  %v1556 = vunpack.c.l.b16 %v1236
  %v1557 = vunpack.c.h.b16 %v1236
  %v1558 = vunpack.c.l.b16 %v1237
  %v1559 = vunpack.c.h.b16 %v1237
  %v1560 = vunpack.c.l.b16 %v1238
  %v1561 = vunpack.c.h.b16 %v1238
  %v1562 = vunpack.c.l.b16 %v1239
  %v1563 = vunpack.c.h.b16 %v1239
  %v1564 = vunpack.c.l.b16 %v1240
  %v1565 = vunpack.c.h.b16 %v1240
  %v1566 = vunpack.c.l.b16 %v1241
  %v1567 = vunpack.c.h.b16 %v1241
  %v1568 = vunpack.c.l.b16 %v1242
  %v1569 = vunpack.c.h.b16 %v1242
  %v1570 = vunpack.c.l.b16 %v1243
  %v1571 = vunpack.c.h.b16 %v1243
  %v1572 = vunpack.c.l.b16 %v1244
  %v1573 = vunpack.c.h.b16 %v1244
  %v1574 = vunpack.c.l.b16 %v1245
  %v1575 = vunpack.c.h.b16 %v1245
  %v1576 = vunpack.c.l.b16 %v1246
  %v1577 = vunpack.c.h.b16 %v1246
  %v1578 = vunpack.c.l.b16 %v1247
  %v1579 = vunpack.c.h.b16 %v1247
  %v1580 = vunpack.c.l.b16 %v1248
  %v1581 = vunpack.c.h.b16 %v1248
  %v1582 = vunpack.c.l.b16 %v1249
  %v1583 = vunpack.c.h.b16 %v1249
  %v1584 = vunpack.c.l.b16 %v1250
  %v1585 = vunpack.c.h.b16 %v1250
  %v1586 = vunpack.c.l.b16 %v1251
  %v1587 = vunpack.c.h.b16 %v1251
  %v1588 = vunpack.c.l.b16 %v1252
  %v1589 = vunpack.c.h.b16 %v1252
  %v1590 = vunpack.c.l.b16 %v1253
  %v1591 = vunpack.c.h.b16 %v1253
  %v1592 = vunpack.c.l.b16 %v1254
  %v1593 = vunpack.c.h.b16 %v1254
  %v1594 = vunpack.c.l.b16 %v1255
  %v1595 = vunpack.c.h.b16 %v1255
  %v1596 = vunpack.c.l.b16 %v1256
  %v1597 = vunpack.c.h.b16 %v1256
  %v1598 = vunpack.c.l.b16 %v1257
  %v1599 = vunpack.c.h.b16 %v1257
  %v1600 = vunpack.c.l.b16 %v1258
  %v1601 = vunpack.c.h.b16 %v1258
  %v1602 = vunpack.c.l.b16 %v1259
  %v1603 = vunpack.c.h.b16 %v1259
  %v1604 = vunpack.c.l.b16 %v1260
  %v1605 = vunpack.c.h.b16 %v1260
  %v1606 = vunpack.c.l.b16 %v1261
  %v1607 = vunpack.c.h.b16 %v1261
  %v1608 = vunpack.c.l.b16 %v1262
  %v1609 = vunpack.c.h.b16 %v1262
  %v1610 = vunpack.c.l.b16 %v1263
  %v1611 = vunpack.c.h.b16 %v1263
  %v1612 = vunpack.c.l.b16 %v1264
  %v1613 = vunpack.c.h.b16 %v1264
  %v1614 = vunpack.c.l.b16 %v1265
  %v1615 = vunpack.c.h.b16 %v1265
  %v1616 = vunpack.c.l.b16 %v1266
  %v1617 = vunpack.c.h.b16 %v1266
  %v1618 = vunpack.c.l.b16 %v1267
  %v1619 = vunpack.c.h.b16 %v1267
  %v1620 = vunpack.c.l.b16 %v1268
  %v1621 = vunpack.c.h.b16 %v1268
  %v1622 = vunpack.c.l.b16 %v1269
  %v1623 = vunpack.c.h.b16 %v1269
  %v1624 = vunpack.c.l.b16 %v1270
  %v1625 = vunpack.c.h.b16 %v1270
  %v1626 = vunpack.c.l.b16 %v1271
  %v1627 = vunpack.c.h.b16 %v1271
  %v1628 = vunpack.c.l.b16 %v1272
  %v1629 = vunpack.c.h.b16 %v1272
  %v1630 = vunpack.c.l.b16 %v1273
  %v1631 = vunpack.c.h.b16 %v1273
  %v1632 = vunpack.c.l.b16 %v1274
  %v1633 = vunpack.c.h.b16 %v1274
  %v1634 = vunpack.c.l.b16 %v1275
  %v1635 = vunpack.c.h.b16 %v1275
  %v1636 = vunpack.c.l.b16 %v1276
  %v1637 = vunpack.c.h.b16 %v1276
  %v1638 = vunpack.c.l.b16 %v1277
  %v1639 = vunpack.c.h.b16 %v1277
  %v1640 = vunpack.c.l.b16 %v1278
  %v1641 = vunpack.c.h.b16 %v1278
  %v1642 = vunpack.c.l.b16 %v1279
  %v1643 = vunpack.c.h.b16 %v1279
  %v1644 = vunpack.c.l.b16 %v1280
  %v1645 = vunpack.c.h.b16 %v1280
  %v1646 = vunpack.c.l.b16 %v1281
  %v1647 = vunpack.c.h.b16 %v1281
  %v1648 = vunpack.c.l.b16 %v1282
  %v1649 = vunpack.c.h.b16 %v1282
  %v1650 = vunpack.c.l.b16 %v1283
  %v1651 = vunpack.c.h.b16 %v1283
  %v1652 = vunpack.c.l.b16 %v1284
  %v1653 = vunpack.c.h.b16 %v1284
  %v1654 = vunpack.c.l.b16 %v1285
  %v1655 = vunpack.c.h.b16 %v1285
  %v1656 = vunpack.c.l.b16 %v1286
  %v1657 = vunpack.c.h.b16 %v1286
  %v1658 = vunpack.c.l.b16 %v1287
  %v1659 = vunpack.c.h.b16 %v1287
  %v1660 = vunpack.c.l.b16 %v1288
  %v1661 = vunpack.c.h.b16 %v1288
  %v1662 = vunpack.c.l.b16 %v1289
  %v1663 = vunpack.c.h.b16 %v1289
  %v1664 = vunpack.c.l.b16 %v1290
  %v1665 = vunpack.c.h.b16 %v1290
  %v1666 = vunpack.c.l.b16 %v1291
  %v1667 = vunpack.c.h.b16 %v1291
  %v1668 = vunpack.c.l.b16 %v1292
  %v1669 = vunpack.c.h.b16 %v1292
  %v1670 = vunpack.c.l.b16 %v1293
  %v1671 = vunpack.c.h.b16 %v1293
  %v1672 = vunpack.c.l.b16 %v1294
  %v1673 = vunpack.c.h.b16 %v1294
  %v1674 = vunpack.c.l.b16 %v1295
  %v1675 = vunpack.c.h.b16 %v1295
  %v1676 = vunpack.c.l.b16 %v1296
  %v1677 = vunpack.c.h.b16 %v1296
  %v1678 = vunpack.c.l.b16 %v1297
  %v1679 = vunpack.c.h.b16 %v1297
  %v1680 = vunpack.c.l.b16 %v1298
  %v1681 = vunpack.c.h.b16 %v1298
  %v1682 = vunpack.c.l.b16 %v1299
  %v1683 = vunpack.c.h.b16 %v1299
  %v1684 = vunpack.c.l.b16 %v1300
  %v1685 = vunpack.c.h.b16 %v1300
  %v1686 = vunpack.c.l.b16 %v1301
  %v1687 = vunpack.c.h.b16 %v1301
  %v1688 = vunpack.c.l.b16 %v1302
  %v1689 = vunpack.c.h.b16 %v1302
  %v1690 = vunpack.c.l.b16 %v1303
  %v1691 = vunpack.c.h.b16 %v1303
  %v1692 = vunpack.c.l.b16 %v1304
  %v1693 = vunpack.c.h.b16 %v1304
  %v1694 = vunpack.c.l.b16 %v1305
  %v1695 = vunpack.c.h.b16 %v1305
  %v1696 = vunpack.c.l.b16 %v1306
  %v1697 = vunpack.c.h.b16 %v1306
  %v1698 = vunpack.c.l.b16 %v1307
  %v1699 = vunpack.c.h.b16 %v1307
  %v1700 = vunpack.c.l.b16 %v1308
  %v1701 = vunpack.c.h.b16 %v1308
  %v1702 = vunpack.c.l.b16 %v1309
  %v1703 = vunpack.c.h.b16 %v1309
  %v1704 = vunpack.c.l.b16 %v1310
  %v1705 = vunpack.c.h.b16 %v1310
  %v1706 = vunpack.c.l.b16 %v1311
  %v1707 = vunpack.c.h.b16 %v1311
  %v1708 = vunpack.c.l.b16 %v1312
  %v1709 = vunpack.c.h.b16 %v1312
  %v1710 = vunpack.c.l.b16 %v1313
  %v1711 = vunpack.c.h.b16 %v1313
  %v1712 = vunpack.c.l.b16 %v1314
  %v1713 = vunpack.c.h.b16 %v1314
  %v1714 = vunpack.c.l.b16 %v1315
  %v1715 = vunpack.c.h.b16 %v1315
  %v1716 = vunpack.c.l.b16 %v1316
  %v1717 = vunpack.c.h.b16 %v1316
  %v1718 = vunpack.c.l.b16 %v1317
  %v1719 = vunpack.c.h.b16 %v1317
  %v1720 = vunpack.c.l.b16 %v1318
  %v1721 = vunpack.c.h.b16 %v1318
  %v1722 = vunpack.c.l.b16 %v1319
  %v1723 = vunpack.c.h.b16 %v1319
  %v1724 = vunpack.c.l.b16 %v1320
  %v1725 = vunpack.c.h.b16 %v1320
  %v1726 = vunpack.c.l.b16 %v1321
  %v1727 = vunpack.c.h.b16 %v1321
  %v1728 = vunpack.c.l.b16 %v1322
  %v1729 = vunpack.c.h.b16 %v1322
  %v1730 = vunpack.c.l.b16 %v1323
  %v1731 = vunpack.c.h.b16 %v1323
  %v1732 = vunpack.c.l.b16 %v1324
  %v1733 = vunpack.c.h.b16 %v1324
  %v1734 = vunpack.c.l.b16 %v1325
  %v1735 = vunpack.c.h.b16 %v1325
  %v1736 = vunpack.c.l.b16 %v1326
  %v1737 = vunpack.c.h.b16 %v1326
  %v1738 = vunpack.c.l.b16 %v1327
  %v1739 = vunpack.c.h.b16 %v1327
  %v1740 = vunpack.c.l.b16 %v1328
  %v1741 = vunpack.c.h.b16 %v1328
  %v1742 = vunpack.c.l.b16 %v1329
  %v1743 = vunpack.c.h.b16 %v1329
  %v1744 = vunpack.c.l.b16 %v1330
  %v1745 = vunpack.c.h.b16 %v1330
  %v1746 = vunpack.c.l.b16 %v1331
  %v1747 = vunpack.c.h.b16 %v1331
  %v1748 = vunpack.c.l.b16 %v1332
  %v1749 = vunpack.c.h.b16 %v1332
  %v1750 = vunpack.c.l.b16 %v1333
  %v1751 = vunpack.c.h.b16 %v1333
  %v1752 = vunpack.c.l.b16 %v1334
  %v1753 = vunpack.c.h.b16 %v1334
  %v1754 = vunpack.c.l.b16 %v1335
  %v1755 = vunpack.c.h.b16 %v1335
  %v1756 = vunpack.c.l.b16 %v1336
  %v1757 = vunpack.c.h.b16 %v1336
  %v1758 = vunpack.c.l.b16 %v1337
  %v1759 = vunpack.c.h.b16 %v1337
  %v1760 = vunpack.c.l.b16 %v1338
  %v1761 = vunpack.c.h.b16 %v1338
  %v1762 = vunpack.c.l.b16 %v1339
  %v1763 = vunpack.c.h.b16 %v1339
  %v1764 = vunpack.c.l.b16 %v1340
  %v1765 = vunpack.c.h.b16 %v1340
  %v1766 = vunpack.c.l.b16 %v1341
  %v1767 = vunpack.c.h.b16 %v1341
  %v1768 = vunpack.c.l.b16 %v1342
  %v1769 = vunpack.c.h.b16 %v1342
  %v1770 = vunpack.c.l.b16 %v1343
  %v1771 = vunpack.c.h.b16 %v1343
  %v1772 = vunpack.c.l.b16 %v1344
  %v1773 = vunpack.c.h.b16 %v1344
  %v1774 = vunpack.c.l.b16 %v1345
  %v1775 = vunpack.c.h.b16 %v1345
  %v1776 = vunpack.c.l.b16 %v1346
  %v1777 = vunpack.c.h.b16 %v1346
  %v1778 = vunpack.c.l.b16 %v1347
  %v1779 = vunpack.c.h.b16 %v1347
  %v1780 = vunpack.c.l.b16 %v1348
  %v1781 = vunpack.c.h.b16 %v1348
  %v1782 = vunpack.c.l.b16 %v1349
  %v1783 = vunpack.c.h.b16 %v1349
  %v1784 = vpack.c.b16 %v1532, %v1528
  %v1785 = vpack.c.b16 %v1533, %v1529
  %v1786 = vpack.c.b16 %v1534, %v1530
  %v1787 = vpack.c.b16 %v1535, %v1531
  %v1788 = vpack.c.b16 %v1540, %v1536
  %v1789 = vpack.c.b16 %v1541, %v1537
  %v1790 = vpack.c.b16 %v1542, %v1538
  %v1791 = vpack.c.b16 %v1543, %v1539
  %v1792 = vpack.c.b16 %v1548, %v1544
  %v1793 = vpack.c.b16 %v1549, %v1545
  %v1794 = vpack.c.b16 %v1550, %v1546
  %v1795 = vpack.c.b16 %v1551, %v1547
  %v1796 = vpack.c.b16 %v1556, %v1552
  %v1797 = vpack.c.b16 %v1557, %v1553
  %v1798 = vpack.c.b16 %v1558, %v1554
  %v1799 = vpack.c.b16 %v1559, %v1555
  %v1800 = vpack.c.b16 %v1564, %v1560
  %v1801 = vpack.c.b16 %v1565, %v1561
  %v1802 = vpack.c.b16 %v1566, %v1562
  %v1803 = vpack.c.b16 %v1567, %v1563
  %v1804 = vpack.c.b16 %v1572, %v1568
  %v1805 = vpack.c.b16 %v1573, %v1569
  %v1806 = vpack.c.b16 %v1574, %v1570
  %v1807 = vpack.c.b16 %v1575, %v1571
  %v1808 = vpack.c.b16 %v1580, %v1576
  %v1809 = vpack.c.b16 %v1581, %v1577
  %v1810 = vpack.c.b16 %v1582, %v1578
  %v1811 = vpack.c.b16 %v1583, %v1579
  %v1812 = vpack.c.b16 %v1588, %v1584
  %v1813 = vpack.c.b16 %v1589, %v1585
  %v1814 = vpack.c.b16 %v1590, %v1586
  %v1815 = vpack.c.b16 %v1591, %v1587
  %v1816 = vpack.c.b16 %v1596, %v1592
  %v1817 = vpack.c.b16 %v1597, %v1593
  %v1818 = vpack.c.b16 %v1598, %v1594
  %v1819 = vpack.c.b16 %v1599, %v1595
  %v1820 = vpack.c.b16 %v1604, %v1600
  %v1821 = vpack.c.b16 %v1605, %v1601
  %v1822 = vpack.c.b16 %v1606, %v1602
  %v1823 = vpack.c.b16 %v1607, %v1603
  %v1824 = vpack.c.b16 %v1612, %v1608
  %v1825 = vpack.c.b16 %v1613, %v1609
  %v1826 = vpack.c.b16 %v1614, %v1610
  %v1827 = vpack.c.b16 %v1615, %v1611
  %v1828 = vpack.c.b16 %v1620, %v1616
  %v1829 = vpack.c.b16 %v1621, %v1617
  %v1830 = vpack.c.b16 %v1622, %v1618
  %v1831 = vpack.c.b16 %v1623, %v1619
  %v1832 = vpack.c.b16 %v1628, %v1624
  %v1833 = vpack.c.b16 %v1629, %v1625
  %v1834 = vpack.c.b16 %v1630, %v1626
  %v1835 = vpack.c.b16 %v1631, %v1627
  %v1836 = vpack.c.b16 %v1636, %v1632
  %v1837 = vpack.c.b16 %v1637, %v1633
  %v1838 = vpack.c.b16 %v1638, %v1634
  %v1839 = vpack.c.b16 %v1639, %v1635
  %v1840 = vpack.c.b16 %v1644, %v1640
  %v1841 = vpack.c.b16 %v1645, %v1641
  %v1842 = vpack.c.b16 %v1646, %v1642
  %v1843 = vpack.c.b16 %v1647, %v1643
  %v1844 = vpack.c.b16 %v1652, %v1648
  %v1845 = vpack.c.b16 %v1653, %v1649
  %v1846 = vpack.c.b16 %v1654, %v1650
  %v1847 = vpack.c.b16 %v1655, %v1651
  %v1848 = vpack.c.b16 %v1660, %v1656
  %v1849 = vpack.c.b16 %v1661, %v1657
  %v1850 = vpack.c.b16 %v1662, %v1658
  %v1851 = vpack.c.b16 %v1663, %v1659
  %v1852 = vpack.c.b16 %v1668, %v1664
  %v1853 = vpack.c.b16 %v1669, %v1665
  %v1854 = vpack.c.b16 %v1670, %v1666
  %v1855 = vpack.c.b16 %v1671, %v1667
  %v1856 = vpack.c.b16 %v1676, %v1672
  %v1857 = vpack.c.b16 %v1677, %v1673
  %v1858 = vpack.c.b16 %v1678, %v1674
  %v1859 = vpack.c.b16 %v1679, %v1675
  %v1860 = vpack.c.b16 %v1684, %v1680
  %v1861 = vpack.c.b16 %v1685, %v1681
  %v1862 = vpack.c.b16 %v1686, %v1682
  %v1863 = vpack.c.b16 %v1687, %v1683
  %v1864 = vpack.c.b16 %v1692, %v1688
  %v1865 = vpack.c.b16 %v1693, %v1689
  %v1866 = vpack.c.b16 %v1694, %v1690
  %v1867 = vpack.c.b16 %v1695, %v1691
  %v1868 = vpack.c.b16 %v1700, %v1696
  %v1869 = vpack.c.b16 %v1701, %v1697
  %v1870 = vpack.c.b16 %v1702, %v1698
  %v1871 = vpack.c.b16 %v1703, %v1699
  %v1872 = vpack.c.b16 %v1708, %v1704
  %v1873 = vpack.c.b16 %v1709, %v1705
  %v1874 = vpack.c.b16 %v1710, %v1706
  %v1875 = vpack.c.b16 %v1711, %v1707
  %v1876 = vpack.c.b16 %v1716, %v1712
  %v1877 = vpack.c.b16 %v1717, %v1713
  %v1878 = vpack.c.b16 %v1718, %v1714
  %v1879 = vpack.c.b16 %v1719, %v1715
  %v1880 = vpack.c.b16 %v1724, %v1720
  %v1881 = vpack.c.b16 %v1725, %v1721
  %v1882 = vpack.c.b16 %v1726, %v1722
  %v1883 = vpack.c.b16 %v1727, %v1723
  %v1884 = vpack.c.b16 %v1732, %v1728
  %v1885 = vpack.c.b16 %v1733, %v1729
  %v1886 = vpack.c.b16 %v1734, %v1730
  %v1887 = vpack.c.b16 %v1735, %v1731
  %v1888 = vpack.c.b16 %v1740, %v1736
  %v1889 = vpack.c.b16 %v1741, %v1737
  %v1890 = vpack.c.b16 %v1742, %v1738
  %v1891 = vpack.c.b16 %v1743, %v1739
  %v1892 = vpack.c.b16 %v1748, %v1744
  %v1893 = vpack.c.b16 %v1749, %v1745
  %v1894 = vpack.c.b16 %v1750, %v1746
  %v1895 = vpack.c.b16 %v1751, %v1747
  %v1896 = vpack.c.b16 %v1756, %v1752
  %v1897 = vpack.c.b16 %v1757, %v1753
  %v1898 = vpack.c.b16 %v1758, %v1754
  %v1899 = vpack.c.b16 %v1759, %v1755
  %v1900 = vpack.c.b16 %v1764, %v1760
  %v1901 = vpack.c.b16 %v1765, %v1761
  %v1902 = vpack.c.b16 %v1766, %v1762
  %v1903 = vpack.c.b16 %v1767, %v1763
  %v1904 = vpack.c.b16 %v1772, %v1768
  %v1905 = vpack.c.b16 %v1773, %v1769
  %v1906 = vpack.c.b16 %v1774, %v1770
  %v1907 = vpack.c.b16 %v1775, %v1771
  %v1908 = vpack.c.b16 %v1780, %v1776
  %v1909 = vpack.c.b16 %v1781, %v1777
  %v1910 = vpack.c.b16 %v1782, %v1778
  %v1911 = vpack.c.b16 %v1783, %v1779
  %2040 = vmatpush.bf16.msra.mxu0 %v1812
  %2041 = vmatpush.bf16.msra.mxu0 %v1808
  %2042 = vmatpush.bf16.msra.mxu0 %v1804
  %2043 = vmatpush.bf16.msra.mxu0 %v1800
  %2044 = vmatpush.bf16.msra.mxu0 %v1796
  %2045 = vmatpush.bf16.msra.mxu0 %v1792
  %2046 = vmatpush.bf16.msra.mxu0 %v1788
  %2047 = vmatpush.bf16.msra.mxu0 %v1784
  %2048 = vmatmul.bf16.gmra.mxu0 %v1384
  %v2049 = vpop.f32.mrf.mxu0
  %v2050 = vadd.f32 %v1352, %v2049
  %v2051 = vpop.f32.mrf.mxu0
  %v2052 = vadd.f32 %v1352, %v2051
  %2053 = vmatmul.bf16.gmra.mxu0 %v1388
  %v2054 = vpop.f32.mrf.mxu0
  %v2055 = vadd.f32 %v1352, %v2054
  %v2056 = vpop.f32.mrf.mxu0
  %v2057 = vadd.f32 %v1352, %v2056
  %2058 = vdwg.mxu0
  %2059 = vmatpush.bf16.msra.mxu0 %v1844
  %2060 = vmatpush.bf16.msra.mxu0 %v1840
  %2061 = vmatpush.bf16.msra.mxu0 %v1836
  %2062 = vmatpush.bf16.msra.mxu0 %v1832
  %2063 = vmatpush.bf16.msra.mxu0 %v1828
  %2064 = vmatpush.bf16.msra.mxu0 %v1824
  %2065 = vmatpush.bf16.msra.mxu0 %v1820
  %2066 = vmatpush.bf16.msra.mxu0 %v1816
  %2067 = vmatmul.bf16.gmra.mxu0 %v1385
  %v2068 = vpop.f32.mrf.mxu0
  %v2069 = vadd.f32 %v2050, %v2068
  %v2070 = vpop.f32.mrf.mxu0
  %v2071 = vadd.f32 %v2052, %v2070
  %2072 = vmatmul.bf16.gmra.mxu0 %v1389
  %v2073 = vpop.f32.mrf.mxu0
  %v2074 = vadd.f32 %v2055, %v2073
  %v2075 = vpop.f32.mrf.mxu0
  %v2076 = vadd.f32 %v2057, %v2075
  %2077 = vdwg.mxu0
  %2078 = vmatpush.bf16.msra.mxu0 %v1876
  %2079 = vmatpush.bf16.msra.mxu0 %v1872
  %2080 = vmatpush.bf16.msra.mxu0 %v1868
  %2081 = vmatpush.bf16.msra.mxu0 %v1864
  %2082 = vmatpush.bf16.msra.mxu0 %v1860
  %2083 = vmatpush.bf16.msra.mxu0 %v1856
  %2084 = vmatpush.bf16.msra.mxu0 %v1852
  %2085 = vmatpush.bf16.msra.mxu0 %v1848
  %2086 = vmatmul.bf16.gmra.mxu0 %v1386
  %v2087 = vpop.f32.mrf.mxu0
  %v2088 = vadd.f32 %v2069, %v2087
  %v2089 = vpop.f32.mrf.mxu0
  %v2090 = vadd.f32 %v2071, %v2089
  %2091 = vmatmul.bf16.gmra.mxu0 %v1390
  %v2092 = vpop.f32.mrf.mxu0
  %v2093 = vadd.f32 %v2074, %v2092
  %v2094 = vpop.f32.mrf.mxu0
  %v2095 = vadd.f32 %v2076, %v2094
  %2096 = vdwg.mxu0
  %2097 = vmatpush.bf16.msra.mxu0 %v1908
  %2098 = vmatpush.bf16.msra.mxu0 %v1904
  %2099 = vmatpush.bf16.msra.mxu0 %v1900
  %2100 = vmatpush.bf16.msra.mxu0 %v1896
  %2101 = vmatpush.bf16.msra.mxu0 %v1892
  %2102 = vmatpush.bf16.msra.mxu0 %v1888
  %2103 = vmatpush.bf16.msra.mxu0 %v1884
  %2104 = vmatpush.bf16.msra.mxu0 %v1880
  %2105 = vmatmul.bf16.gmra.mxu0 %v1387
  %v2106 = vpop.f32.mrf.mxu0
  %v2107 = vadd.f32 %v2088, %v2106
  %v2108 = vpop.f32.mrf.mxu0
  %v2109 = vadd.f32 %v2090, %v2108
  %2110 = vmatmul.bf16.gmra.mxu0 %v1391
  %v2111 = vpop.f32.mrf.mxu0
  %v2112 = vadd.f32 %v2093, %v2111
  %v2113 = vpop.f32.mrf.mxu0
  %v2114 = vadd.f32 %v2095, %v2113
  %2115 = vdwg.mxu0
  %2116 = vmatpush.bf16.msra.mxu0 %v1813
  %2117 = vmatpush.bf16.msra.mxu0 %v1809
  %2118 = vmatpush.bf16.msra.mxu0 %v1805
  %2119 = vmatpush.bf16.msra.mxu0 %v1801
  %2120 = vmatpush.bf16.msra.mxu0 %v1797
  %2121 = vmatpush.bf16.msra.mxu0 %v1793
  %2122 = vmatpush.bf16.msra.mxu0 %v1789
  %2123 = vmatpush.bf16.msra.mxu0 %v1785
  %2124 = vmatmul.bf16.gmra.mxu0 %v1384
  %v2125 = vpop.f32.mrf.mxu0
  %v2126 = vadd.f32 %v1353, %v2125
  %v2127 = vpop.f32.mrf.mxu0
  %v2128 = vadd.f32 %v1353, %v2127
  %2129 = vmatmul.bf16.gmra.mxu0 %v1388
  %v2130 = vpop.f32.mrf.mxu0
  %v2131 = vadd.f32 %v1353, %v2130
  %v2132 = vpop.f32.mrf.mxu0
  %v2133 = vadd.f32 %v1353, %v2132
  %2134 = vdwg.mxu0
  %2135 = vmatpush.bf16.msra.mxu0 %v1845
  %2136 = vmatpush.bf16.msra.mxu0 %v1841
  %2137 = vmatpush.bf16.msra.mxu0 %v1837
  %2138 = vmatpush.bf16.msra.mxu0 %v1833
  %2139 = vmatpush.bf16.msra.mxu0 %v1829
  %2140 = vmatpush.bf16.msra.mxu0 %v1825
  %2141 = vmatpush.bf16.msra.mxu0 %v1821
  %2142 = vmatpush.bf16.msra.mxu0 %v1817
  %2143 = vmatmul.bf16.gmra.mxu0 %v1385
  %v2144 = vpop.f32.mrf.mxu0
  %v2145 = vadd.f32 %v2126, %v2144
  %v2146 = vpop.f32.mrf.mxu0
  %v2147 = vadd.f32 %v2128, %v2146
  %2148 = vmatmul.bf16.gmra.mxu0 %v1389
  %v2149 = vpop.f32.mrf.mxu0
  %v2150 = vadd.f32 %v2131, %v2149
  %v2151 = vpop.f32.mrf.mxu0
  %v2152 = vadd.f32 %v2133, %v2151
  %2153 = vdwg.mxu0
  %2154 = vmatpush.bf16.msra.mxu0 %v1877
  %2155 = vmatpush.bf16.msra.mxu0 %v1873
  %2156 = vmatpush.bf16.msra.mxu0 %v1869
  %2157 = vmatpush.bf16.msra.mxu0 %v1865
  %2158 = vmatpush.bf16.msra.mxu0 %v1861
  %2159 = vmatpush.bf16.msra.mxu0 %v1857
  %2160 = vmatpush.bf16.msra.mxu0 %v1853
  %2161 = vmatpush.bf16.msra.mxu0 %v1849
  %2162 = vmatmul.bf16.gmra.mxu0 %v1386
  %v2163 = vpop.f32.mrf.mxu0
  %v2164 = vadd.f32 %v2145, %v2163
  %v2165 = vpop.f32.mrf.mxu0
  %v2166 = vadd.f32 %v2147, %v2165
  %2167 = vmatmul.bf16.gmra.mxu0 %v1390
  %v2168 = vpop.f32.mrf.mxu0
  %v2169 = vadd.f32 %v2150, %v2168
  %v2170 = vpop.f32.mrf.mxu0
  %v2171 = vadd.f32 %v2152, %v2170
  %2172 = vdwg.mxu0
  %2173 = vmatpush.bf16.msra.mxu0 %v1909
  %2174 = vmatpush.bf16.msra.mxu0 %v1905
  %2175 = vmatpush.bf16.msra.mxu0 %v1901
  %2176 = vmatpush.bf16.msra.mxu0 %v1897
  %2177 = vmatpush.bf16.msra.mxu0 %v1893
  %2178 = vmatpush.bf16.msra.mxu0 %v1889
  %2179 = vmatpush.bf16.msra.mxu0 %v1885
  %2180 = vmatpush.bf16.msra.mxu0 %v1881
  %2181 = vmatmul.bf16.gmra.mxu0 %v1387
  %v2182 = vpop.f32.mrf.mxu0
  %v2183 = vadd.f32 %v2164, %v2182
  %v2184 = vpop.f32.mrf.mxu0
  %v2185 = vadd.f32 %v2166, %v2184
  %2186 = vmatmul.bf16.gmra.mxu0 %v1391
  %v2187 = vpop.f32.mrf.mxu0
  %v2188 = vadd.f32 %v2169, %v2187
  %v2189 = vpop.f32.mrf.mxu0
  %v2190 = vadd.f32 %v2171, %v2189
  %2191 = vdwg.mxu0
  %2192 = vmatpush.bf16.msra.mxu0 %v1814
  %2193 = vmatpush.bf16.msra.mxu0 %v1810
  %2194 = vmatpush.bf16.msra.mxu0 %v1806
  %2195 = vmatpush.bf16.msra.mxu0 %v1802
  %2196 = vmatpush.bf16.msra.mxu0 %v1798
  %2197 = vmatpush.bf16.msra.mxu0 %v1794
  %2198 = vmatpush.bf16.msra.mxu0 %v1790
  %2199 = vmatpush.bf16.msra.mxu0 %v1786
  %2200 = vmatmul.bf16.gmra.mxu0 %v1384
  %v2201 = vpop.f32.mrf.mxu0
  %v2202 = vadd.f32 %v1354, %v2201
  %v2203 = vpop.f32.mrf.mxu0
  %v2204 = vadd.f32 %v1354, %v2203
  %2205 = vmatmul.bf16.gmra.mxu0 %v1388
  %v2206 = vpop.f32.mrf.mxu0
  %v2207 = vadd.f32 %v1354, %v2206
  %v2208 = vpop.f32.mrf.mxu0
  %v2209 = vadd.f32 %v1354, %v2208
  %2210 = vdwg.mxu0
  %2211 = vmatpush.bf16.msra.mxu0 %v1846
  %2212 = vmatpush.bf16.msra.mxu0 %v1842
  %2213 = vmatpush.bf16.msra.mxu0 %v1838
  %2214 = vmatpush.bf16.msra.mxu0 %v1834
  %2215 = vmatpush.bf16.msra.mxu0 %v1830
  %2216 = vmatpush.bf16.msra.mxu0 %v1826
  %2217 = vmatpush.bf16.msra.mxu0 %v1822
  %2218 = vmatpush.bf16.msra.mxu0 %v1818
  %2219 = vmatmul.bf16.gmra.mxu0 %v1385
  %v2220 = vpop.f32.mrf.mxu0
  %v2221 = vadd.f32 %v2202, %v2220
  %v2222 = vpop.f32.mrf.mxu0
  %v2223 = vadd.f32 %v2204, %v2222
  %2224 = vmatmul.bf16.gmra.mxu0 %v1389
  %v2225 = vpop.f32.mrf.mxu0
  %v2226 = vadd.f32 %v2207, %v2225
  %v2227 = vpop.f32.mrf.mxu0
  %v2228 = vadd.f32 %v2209, %v2227
  %2229 = vdwg.mxu0
  %2230 = vmatpush.bf16.msra.mxu0 %v1878
  %2231 = vmatpush.bf16.msra.mxu0 %v1874
  %2232 = vmatpush.bf16.msra.mxu0 %v1870
  %2233 = vmatpush.bf16.msra.mxu0 %v1866
  %2234 = vmatpush.bf16.msra.mxu0 %v1862
  %2235 = vmatpush.bf16.msra.mxu0 %v1858
  %2236 = vmatpush.bf16.msra.mxu0 %v1854
  %2237 = vmatpush.bf16.msra.mxu0 %v1850
  %2238 = vmatmul.bf16.gmra.mxu0 %v1386
  %v2239 = vpop.f32.mrf.mxu0
  %v2240 = vadd.f32 %v2221, %v2239
  %v2241 = vpop.f32.mrf.mxu0
  %v2242 = vadd.f32 %v2223, %v2241
  %2243 = vmatmul.bf16.gmra.mxu0 %v1390
  %v2244 = vpop.f32.mrf.mxu0
  %v2245 = vadd.f32 %v2226, %v2244
  %v2246 = vpop.f32.mrf.mxu0
  %v2247 = vadd.f32 %v2228, %v2246
  %2248 = vdwg.mxu0
  %2249 = vmatpush.bf16.msra.mxu0 %v1910
  %2250 = vmatpush.bf16.msra.mxu0 %v1906
  %2251 = vmatpush.bf16.msra.mxu0 %v1902
  %2252 = vmatpush.bf16.msra.mxu0 %v1898
  %2253 = vmatpush.bf16.msra.mxu0 %v1894
  %2254 = vmatpush.bf16.msra.mxu0 %v1890
  %2255 = vmatpush.bf16.msra.mxu0 %v1886
  %2256 = vmatpush.bf16.msra.mxu0 %v1882
  %2257 = vmatmul.bf16.gmra.mxu0 %v1387
  %v2258 = vpop.f32.mrf.mxu0
  %v2259 = vadd.f32 %v2240, %v2258
  %v2260 = vpop.f32.mrf.mxu0
  %v2261 = vadd.f32 %v2242, %v2260
  %2262 = vmatmul.bf16.gmra.mxu0 %v1391
  %v2263 = vpop.f32.mrf.mxu0
  %v2264 = vadd.f32 %v2245, %v2263
  %v2265 = vpop.f32.mrf.mxu0
  %v2266 = vadd.f32 %v2247, %v2265
  %2267 = vdwg.mxu0
  %2268 = vmatpush.bf16.msra.mxu0 %v1815
  %2269 = vmatpush.bf16.msra.mxu0 %v1811
  %2270 = vmatpush.bf16.msra.mxu0 %v1807
  %2271 = vmatpush.bf16.msra.mxu0 %v1803
  %2272 = vmatpush.bf16.msra.mxu0 %v1799
  %2273 = vmatpush.bf16.msra.mxu0 %v1795
  %2274 = vmatpush.bf16.msra.mxu0 %v1791
  %2275 = vmatpush.bf16.msra.mxu0 %v1787
  %2276 = vmatmul.bf16.gmra.mxu0 %v1384
  %v2277 = vpop.f32.mrf.mxu0
  %v2278 = vadd.f32 %v1355, %v2277
  %v2279 = vpop.f32.mrf.mxu0
  %v2280 = vadd.f32 %v1355, %v2279
  %2281 = vmatmul.bf16.gmra.mxu0 %v1388
  %v2282 = vpop.f32.mrf.mxu0
  %v2283 = vadd.f32 %v1355, %v2282
  %v2284 = vpop.f32.mrf.mxu0
  %v2285 = vadd.f32 %v1355, %v2284
  %2286 = vdwg.mxu0
  %2287 = vmatpush.bf16.msra.mxu0 %v1847
  %2288 = vmatpush.bf16.msra.mxu0 %v1843
  %2289 = vmatpush.bf16.msra.mxu0 %v1839
  %2290 = vmatpush.bf16.msra.mxu0 %v1835
  %2291 = vmatpush.bf16.msra.mxu0 %v1831
  %2292 = vmatpush.bf16.msra.mxu0 %v1827
  %2293 = vmatpush.bf16.msra.mxu0 %v1823
  %2294 = vmatpush.bf16.msra.mxu0 %v1819
  %2295 = vmatmul.bf16.gmra.mxu0 %v1385
  %v2296 = vpop.f32.mrf.mxu0
  %v2297 = vadd.f32 %v2278, %v2296
  %v2298 = vpop.f32.mrf.mxu0
  %v2299 = vadd.f32 %v2280, %v2298
  %2300 = vmatmul.bf16.gmra.mxu0 %v1389
  %v2301 = vpop.f32.mrf.mxu0
  %v2302 = vadd.f32 %v2283, %v2301
  %v2303 = vpop.f32.mrf.mxu0
  %v2304 = vadd.f32 %v2285, %v2303
  %2305 = vdwg.mxu0
  %2306 = vmatpush.bf16.msra.mxu0 %v1879
  %2307 = vmatpush.bf16.msra.mxu0 %v1875
  %2308 = vmatpush.bf16.msra.mxu0 %v1871
  %2309 = vmatpush.bf16.msra.mxu0 %v1867
  %2310 = vmatpush.bf16.msra.mxu0 %v1863
  %2311 = vmatpush.bf16.msra.mxu0 %v1859
  %2312 = vmatpush.bf16.msra.mxu0 %v1855
  %2313 = vmatpush.bf16.msra.mxu0 %v1851
  %2314 = vmatmul.bf16.gmra.mxu0 %v1386
  %v2315 = vpop.f32.mrf.mxu0
  %v2316 = vadd.f32 %v2297, %v2315
  %v2317 = vpop.f32.mrf.mxu0
  %v2318 = vadd.f32 %v2299, %v2317
  %2319 = vmatmul.bf16.gmra.mxu0 %v1390
  %v2320 = vpop.f32.mrf.mxu0
  %v2321 = vadd.f32 %v2302, %v2320
  %v2322 = vpop.f32.mrf.mxu0
  %v2323 = vadd.f32 %v2304, %v2322
  %2324 = vdwg.mxu0
  %2325 = vmatpush.bf16.msra.mxu0 %v1911
  %2326 = vmatpush.bf16.msra.mxu0 %v1907
  %2327 = vmatpush.bf16.msra.mxu0 %v1903
  %2328 = vmatpush.bf16.msra.mxu0 %v1899
  %2329 = vmatpush.bf16.msra.mxu0 %v1895
  %2330 = vmatpush.bf16.msra.mxu0 %v1891
  %2331 = vmatpush.bf16.msra.mxu0 %v1887
  %2332 = vmatpush.bf16.msra.mxu0 %v1883
  %2333 = vmatmul.bf16.gmra.mxu0 %v1387
  %v2334 = vpop.f32.mrf.mxu0
  %v2335 = vadd.f32 %v2316, %v2334
  %v2336 = vpop.f32.mrf.mxu0
  %v2337 = vadd.f32 %v2318, %v2336
  %2338 = vmatmul.bf16.gmra.mxu0 %v1391
  %v2339 = vpop.f32.mrf.mxu0
  %v2340 = vadd.f32 %v2321, %v2339
  %v2341 = vpop.f32.mrf.mxu0
  %v2342 = vadd.f32 %v2323, %v2341
  %2343 = vdwg.mxu0
  %v2344 = vmax.f32 %v2107, 0.0
  %v2345 = vmax.f32 %v2183, 0.0
  %v2346 = vmax.f32 %v2259, 0.0
  %v2347 = vmax.f32 %v2335, 0.0
  %v2348 = vmax.f32 %v2109, 0.0
  %v2349 = vmax.f32 %v2185, 0.0
  %v2350 = vmax.f32 %v2261, 0.0
  %v2351 = vmax.f32 %v2337, 0.0
  %v2352 = vmax.f32 %v2112, 0.0
  %v2353 = vmax.f32 %v2188, 0.0
  %v2354 = vmax.f32 %v2264, 0.0
  %v2355 = vmax.f32 %v2340, 0.0
  %v2356 = vmax.f32 %v2114, 0.0
  %v2357 = vmax.f32 %v2190, 0.0
  %v2358 = vmax.f32 %v2266, 0.0
  %v2359 = vmax.f32 %v2342, 0.0
  %2360 = vst [vmem:[%s7] sm:$0xff] %v2344
  %2361 = vst [vmem:[%s7 + $0x8] sm:$0xff] %v2345
  %2362 = vst [vmem:[%s7 + $0x10] sm:$0xff] %v2346
  %vm2363 = vcmask 261120
  %2364 = vst.msk [vmem:[%s7 + $0x18] sm:$0xff] %vm2363, %v2347
  %2365 = vst [vmem:[%s7 + $0x20] sm:$0xff] %v2348
  %2366 = vst [vmem:[%s7 + $0x28] sm:$0xff] %v2349
  %2367 = vst [vmem:[%s7 + $0x30] sm:$0xff] %v2350
  %2368 = vst.msk [vmem:[%s7 + $0x38] sm:$0xff] %vm2363, %v2351
  %2369 = vst [vmem:[%s7 + $0x40] sm:$0xff] %v2352
  %2370 = vst [vmem:[%s7 + $0x48] sm:$0xff] %v2353
  %2371 = vst [vmem:[%s7 + $0x50] sm:$0xff] %v2354
  %2372 = vst.msk [vmem:[%s7 + $0x58] sm:$0xff] %vm2363, %v2355
  %2373 = vst [vmem:[%s7 + $0x60] sm:$0x3] %v2356
  %2374 = vst [vmem:[%s7 + $0x68] sm:$0x3] %v2357
  %2375 = vst [vmem:[%s7 + $0x70] sm:$0x3] %v2358
  %vm2376 = vcmask 254976
  %2377 = vst.msk [vmem:[%s7 + $0x78] sm:$0x3] %vm2376, %v2359
  // Predicated region
  $region75: #{conv_unit_forward.1} parent=0 // pred_check
    _
  $region76: #{conv_unit_forward.1} parent=0 // pred_check_branch
    %2379 = sbr.rel (0) target = $region78
  $region77: #{conv_unit_forward.1} parent=0 // pred_region
    _
  $region78: #{conv_unit_forward.1} parent=0 // pred_fallthru
    _
  // Predicated region
  $region79: #{conv_unit_forward.1} parent=0 // pred_check
    _
  $region80: #{conv_unit_forward.1} parent=0 // pred_check_branch
    %2381 = sbr.rel (0) target = $region82
  $region81: #{conv_unit_forward.1} parent=0 // pred_region
    _
  $region82: #{conv_unit_forward.1} parent=0 // pred_fallthru
    _
  %2382 = vsyncmov [#allocation8]
  %s2383 = vpop.sfrf %2382
  %p2384 = scmp.eq.s32.totalorder %s2383, 0
  %p2385 = pneg %p2384
  %2387 = shalt.err (%p2385)
  %s2388 = scalar_lea.sflag [#allocation8], 1
  %2389 = vsyncmov %s2388
  %s2390 = vpop.sfrf %2389
  %p2391 = scmp.eq.s32.totalorder %s2390, 0
  %p2392 = pneg %p2391
  %2394 = shalt.err (%p2392)
  %s2395 = scalar_lea.sflag [#allocation8], 2
  %2396 = vsyncmov %s2395
  %s2397 = vpop.sfrf %2396
  %p2398 = scmp.eq.s32.totalorder %s2397, 0
  %p2399 = pneg %p2398
  %2401 = shalt.err (%p2399)

</llo_original>
